<compile_context>
chip_gen: v7x
topology: tpu7x:2x2x1
jax: 0.10.0
libtpu: 0.0.40
codegen_flags: <defaults>
</compile_context>

<pallas_src>
import functools

import jax
import jax.numpy as jnp
import numpy as np
from jax.experimental import pallas as pl
from jax.experimental.pallas import tpu as pltpu

# ---------------------------------------------------------------------------
# Model hyper-parameters (consistent with the module's __init__)
# ---------------------------------------------------------------------------
VOCAB = 5                                   # vocab_size
HIDDEN = 16                                 # hidden_dim
NUM_LAYERS = 3                              # num_layers -> dilations 1, 2, 4
KSIZE = 3                                   # kernel_size
SEQ_LEN = 128                               # seq_len (module default is 512)
BATCH = 2
CIN1 = 8                                    # layer-1 in-channels padded 5 -> 8
DILATIONS = tuple(2 ** i for i in range(NUM_LAYERS))


# ---------------------------------------------------------------------------
# Fused kernel: one-hot + 3 dilated conv layers + ReLU + mask + output head
# ---------------------------------------------------------------------------
def fused_kernel(tok_ref, msk_ref,
                 w1_ref, b1_ref, w2_ref, b2_ref, w3_ref, b3_ref,
                 wh1_ref, bh1_ref, wh2_ref, bh2_ref,
                 o_ref, feats_ref, flat_ref, *, seq_len, batch):
    # tok_ref  : (1, B*L) int32 token ids
    # msk_ref  : (1, B*L) int32 (1 = masked / padded position)
    # wX_ref   : (H, K*Cin) conv taps stacked along contraction axis
    # bX_ref   : (H, 1)
    # wh1_ref  : (H*L, H), bh1_ref: (1, H), wh2_ref: (H, 1), bh2_ref: (1, 1)
    # o_ref    : (B, 1)
    # feats_ref: (H, B*L)   VMEM scratch (post-mask conv features)
    # flat_ref : (B, H*L)   VMEM scratch (channel-major flatten)
    n = batch * seq_len
    cin1 = w1_ref.shape[1] // KSIZE

    # ---- hoisted per-kernel constants (computed once, reused by every tap)
    seg_pos = jax.lax.broadcasted_iota(jnp.int32, (1, n), 1) & (seq_len - 1)
    shift_keep = {}
    for d in DILATIONS:
        shift_keep[d] = (seg_pos < (seq_len - d)).astype(jnp.float32)
        shift_keep[-d] = (seg_pos >= d).astype(jnp.float32)

    # ---- padded channel-first one-hot built in-kernel (2 vreg VPU ops)
    tok = tok_ref[...]                                           # (1, B*L)
    ch = jax.lax.broadcasted_iota(jnp.int32, (cin1, n), 0)       # (CIN1, B*L)
    x = (ch == tok).astype(jnp.float32)                          # (CIN1, B*L)

    def shift(v, off):
        """w[c, j] = v[c, j + off], zeroed outside the length-seq_len segment
        that lane j belongs to (also stops bleed across the batch boundary)."""
        if off == 0:
            return v
        assert abs(off) < seq_len, "shift must stay inside one sequence"
        rolled = pltpu.roll(v, shift=(-off) % n, axis=1)         # XLU
        return rolled * shift_keep[off]                          # VPU

    def conv_relu(h, w_ref, b_ref, d):
        """Conv1d(kernel=3, padding=d, dilation=d) + ReLU as ONE MXU matmul."""
        taps = [shift(h, (k - 1) * d) for k in range(KSIZE)]
        xs = jnp.concatenate(taps, axis=0)                       # (K*Cin, B*L)
        z = jnp.dot(w_ref[...], xs,
                    preferred_element_type=jnp.float32) + b_ref[...]
        return jnp.maximum(z, 0.0)

    h = conv_relu(x, w1_ref, b1_ref, DILATIONS[0])
    h = conv_relu(h, w2_ref, b2_ref, DILATIONS[1])
    h = conv_relu(h, w3_ref, b3_ref, DILATIONS[2])

    # x = x * (~mask)   (broadcast over channels)
    keep = (msk_ref[...] == 0).astype(jnp.float32)               # (1, B*L)
    feats_ref[...] = h * keep                                    # (H, B*L)

    hid = feats_ref.shape[0]
    # PyTorch x.flatten(1) on (B, H, L): flat[b, c*L + l] = feats[c, b*L + l].
    # One (1, B*L) load per channel, then `batch` lane-aligned (1, L) stores
    # sliced from the loaded row (vreg-aligned slices; guaranteed lowering).
    # NOTE: a per-batch (H, L) -> (1, H*L) value reshape would collapse this
    # further, pending confirmed Mosaic sublane->lane shape-cast support.
    for c in range(hid):
        row = feats_ref[c:c + 1, :]                              # (1, B*L)
        for b in range(batch):
            flat_ref[b:b + 1, c * seq_len:(c + 1) * seq_len] = (
                row[:, b * seq_len:(b + 1) * seq_len])

    # output head: Linear -> ReLU -> Linear -> Sigmoid (exact)
    z1 = jnp.dot(flat_ref[...], wh1_ref[...],
                 preferred_element_type=jnp.float32) + bh1_ref[...]
    a1 = jnp.maximum(z1, 0.0)
    z2 = jnp.dot(a1, wh2_ref[...],
                 preferred_element_type=jnp.float32) + bh2_ref[...]
    o_ref[...] = 1.0 / (1.0 + jnp.exp(-z2))


# ---------------------------------------------------------------------------
# One-time parameter preparation (all torch-layout re-layouts hoisted here)
# ---------------------------------------------------------------------------
def _stack_conv_weight(w, cin_pad):
    # torch Conv1d weight (out_ch=H, in_ch, K) -> (H, K*cin_pad),
    # column index = k*cin_pad + c  (extra channels zero-padded)
    hdim, cin, k = w.shape
    wt = jnp.transpose(w, (0, 2, 1))                             # (H, K, Cin)
    wt = jnp.pad(wt, ((0, 0), (0, 0), (0, cin_pad - cin)))       # (H, K, pad)
    return wt.reshape(hdim, k * cin_pad)


def prepare_params(conv_params, head_params):
    """Call ONCE. Returns kernel-layout parameters (tuple, kernel arg order)."""
    (w1, b1), (w2, b2), (w3, b3) = conv_params
    wh1, bh1, wh2, bh2 = head_params                             # torch layouts
    prepared = (
        _stack_conv_weight(w1, CIN1), b1.reshape(HIDDEN, 1),
        _stack_conv_weight(w2, HIDDEN), b2.reshape(HIDDEN, 1),
        _stack_conv_weight(w3, HIDDEN), b3.reshape(HIDDEN, 1),
        wh1.T,                     # (H*L, H)
        bh1.reshape(1, HIDDEN),
        wh2.T,                     # (H, 1)
        bh2.reshape(1, 1),
    )
    return jax.tree_util.tree_map(jnp.asarray, prepared)


# ---------------------------------------------------------------------------
# Jitted forward: only the per-input reshapes/casts + one pallas_call
# ---------------------------------------------------------------------------
@jax.jit
def rna_conv1d_forward(tokens, mask, params):
    """tokens: (B, L) int32 token ids; mask: (B, L) bool (True = masked)."""
    bsz, seq_len = tokens.shape
    assert seq_len & (seq_len - 1) == 0, "seq_len must be a power of two"
    assert all(0 < d < seq_len for d in DILATIONS)
    n = bsz * seq_len

    tok = tokens.reshape(1, n).astype(jnp.int32)                 # (1, B*L)
    msk = mask.reshape(1, n).astype(jnp.int32)                   # (1, B*L)

    kernel = functools.partial(fused_kernel, seq_len=seq_len, batch=bsz)
    out = pl.pallas_call(
        kernel,
        out_shape=jax.ShapeDtypeStruct((bsz, 1), jnp.float32),
        scratch_shapes=[
            pltpu.VMEM((HIDDEN, n), jnp.float32),                # feats
            pltpu.VMEM((bsz, HIDDEN * seq_len), jnp.float32),    # flatten
        ],
    )(tok, msk, *params)
    return out[:, 0]                                             # .squeeze(-1)


# ---------------------------------------------------------------------------
# Pure-JAX reference (mirrors the PyTorch module op-by-op)
# ---------------------------------------------------------------------------
def reference_forward(x, mask, conv_params, head_params):
    h = jnp.transpose(x, (0, 2, 1))                              # (B, V, L) NCW
    for (w, b), d in zip(conv_params, DILATIONS):
        length = h.shape[-1]
        hp = jnp.pad(h, ((0, 0), (0, 0), (d, d)))
        acc = b[None, :, None]
        for k in range(KSIZE):
            acc = acc + jnp.einsum('bcl,oc->bol',
                                   hp[:, :, k * d:k * d + length], w[:, :, k])
        h = jnp.maximum(acc, 0.0)
    h = h * (1.0 - mask.astype(jnp.float32))[:, None, :]
    flat = h.reshape(h.shape[0], -1)                             # flatten(1), NCW
    wh1, bh1, wh2, bh2 = head_params
    z = jnp.maximum(flat @ wh1.T + bh1, 0.0) @ wh2.T + bh2
    return jax.nn.sigmoid(z)[:, 0]


# ---------------------------------------------------------------------------
# Deterministic parameters (stored in torch layouts) and inputs
# ---------------------------------------------------------------------------
def make_params(key):
    ks = jax.random.split(key, 10)

    def init(k, shape, fan_in):
        return (jax.random.normal(k, shape, jnp.float32) /
                jnp.sqrt(jnp.float32(fan_in)))

    # conv weights in torch Conv1d layout: (out_ch, in_ch, k)
    w1 = init(ks[0], (HIDDEN, VOCAB, KSIZE), VOCAB * KSIZE)
    b1 = init(ks[1], (HIDDEN,), VOCAB * KSIZE)
    w2 = init(ks[2], (HIDDEN, HIDDEN, KSIZE), HIDDEN * KSIZE)
    b2 = init(ks[3], (HIDDEN,), HIDDEN * KSIZE)
    w3 = init(ks[4], (HIDDEN, HIDDEN, KSIZE), HIDDEN * KSIZE)
    b3 = init(ks[5], (HIDDEN,), HIDDEN * KSIZE)
    conv_params = ((w1, b1), (w2, b2), (w3, b3))

    # head in torch Linear layout: weight (out_features, in_features)
    wh1 = init(ks[6], (HIDDEN, HIDDEN * SEQ_LEN), HIDDEN * SEQ_LEN)
    bh1 = init(ks[7], (HIDDEN,), HIDDEN * SEQ_LEN)
    wh2 = init(ks[8], (1, HIDDEN), HIDDEN)
    bh2 = init(ks[9], (1,), HIDDEN)
    head_params = (wh1, bh1, wh2, bh2)
    return conv_params, head_params


if __name__ == "__main__":
    key = jax.random.PRNGKey(0)
    k_par, k_tok, k_len = jax.random.split(key, 3)

    conv_params, head_params = make_params(k_par)
    params = prepare_params(conv_params, head_params)            # one-time

    # RNA tokens + padding mask (True = masked position)
    tokens = jax.random.randint(k_tok, (BATCH, SEQ_LEN), 0, VOCAB,
                                dtype=jnp.int32)
    lens = jax.random.randint(k_len, (BATCH,), SEQ_LEN // 2, SEQ_LEN)
    mask = jnp.arange(SEQ_LEN)[None, :] >= lens[:, None]         # (B, L) bool

    out = jax.block_until_ready(rna_conv1d_forward(tokens, mask, params))

    x = jax.nn.one_hot(tokens, VOCAB, dtype=jnp.float32)         # (B, L, V)
    ref = jax.block_until_ready(
        reference_forward(x, mask, conv_params, head_params))

    assert out.shape == (BATCH,)
    np.testing.assert_allclose(np.asarray(out), np.asarray(ref),
                               rtol=2e-3, atol=2e-3)
    print("KERNEL_OK")
</pallas_src>

<mosaic_0001>
module attributes {stable_mosaic.version = 11 : i64} {
  func.func @fused_kernel(%arg0: memref<1x256xi32, #tpu.memory_space<vmem>>, %arg1: memref<1x256xi32, #tpu.memory_space<vmem>>, %arg2: memref<16x24xf32, #tpu.memory_space<vmem>>, %arg3: memref<16x1xf32, #tpu.memory_space<vmem>>, %arg4: memref<16x48xf32, #tpu.memory_space<vmem>>, %arg5: memref<16x1xf32, #tpu.memory_space<vmem>>, %arg6: memref<16x48xf32, #tpu.memory_space<vmem>>, %arg7: memref<16x1xf32, #tpu.memory_space<vmem>>, %arg8: memref<2048x16xf32, #tpu.memory_space<vmem>>, %arg9: memref<1x16xf32, #tpu.memory_space<vmem>>, %arg10: memref<16x1xf32, #tpu.memory_space<vmem>>, %arg11: memref<1x1xf32, #tpu.memory_space<vmem>>, %arg12: memref<2x1xf32, #tpu.memory_space<vmem>>, %arg13: memref<16x256xf32, #tpu.memory_space<vmem>>, %arg14: memref<2x2048xf32, #tpu.memory_space<vmem>>) attributes {dimension_semantics = [], scalar_prefetch = 0 : i64, scratch_operands = 2 : i64, tpu.core_type = #tpu.core_type<tc>} {
    %0 = tpu.iota {dimensions = array<i32: 1>} : vector<1x256xi32>
    %c127_i32 = arith.constant 127 : i32
    %1 = vector.broadcast %c127_i32 : i32 to vector<1x256xi32>
    %2 = arith.andi %0, %1 : vector<1x256xi32>
    %c127_i32_0 = arith.constant 127 : i32
    %3 = vector.broadcast %c127_i32_0 : i32 to vector<1x256xi32>
    %4 = arith.cmpi slt, %2, %3 : vector<1x256xi32>
    %5 = arith.extui %4 : vector<1x256xi1> to vector<1x256xi32>
    %6 = arith.sitofp %5 : vector<1x256xi32> to vector<1x256xf32>
    %c1_i32 = arith.constant 1 : i32
    %7 = vector.broadcast %c1_i32 : i32 to vector<1x256xi32>
    %8 = arith.cmpi sge, %2, %7 : vector<1x256xi32>
    %9 = arith.extui %8 : vector<1x256xi1> to vector<1x256xi32>
    %10 = arith.sitofp %9 : vector<1x256xi32> to vector<1x256xf32>
    %c126_i32 = arith.constant 126 : i32
    %11 = vector.broadcast %c126_i32 : i32 to vector<1x256xi32>
    %12 = arith.cmpi slt, %2, %11 : vector<1x256xi32>
    %13 = arith.extui %12 : vector<1x256xi1> to vector<1x256xi32>
    %14 = arith.sitofp %13 : vector<1x256xi32> to vector<1x256xf32>
    %c2_i32 = arith.constant 2 : i32
    %15 = vector.broadcast %c2_i32 : i32 to vector<1x256xi32>
    %16 = arith.cmpi sge, %2, %15 : vector<1x256xi32>
    %17 = arith.extui %16 : vector<1x256xi1> to vector<1x256xi32>
    %18 = arith.sitofp %17 : vector<1x256xi32> to vector<1x256xf32>
    %c124_i32 = arith.constant 124 : i32
    %19 = vector.broadcast %c124_i32 : i32 to vector<1x256xi32>
    %20 = arith.cmpi slt, %2, %19 : vector<1x256xi32>
    %21 = arith.extui %20 : vector<1x256xi1> to vector<1x256xi32>
    %22 = arith.sitofp %21 : vector<1x256xi32> to vector<1x256xf32>
    %c4_i32 = arith.constant 4 : i32
    %23 = vector.broadcast %c4_i32 : i32 to vector<1x256xi32>
    %24 = arith.cmpi sge, %2, %23 : vector<1x256xi32>
    %25 = arith.extui %24 : vector<1x256xi1> to vector<1x256xi32>
    %26 = arith.sitofp %25 : vector<1x256xi32> to vector<1x256xf32>
    %c0 = arith.constant 0 : index
    %c0_1 = arith.constant 0 : index
    %27 = vector.load %arg0[%c0, %c0_1] : memref<1x256xi32, #tpu.memory_space<vmem>>, vector<1x256xi32>
    %28 = tpu.iota {dimensions = array<i32: 0>} : vector<8x256xi32>
    %29 = vector.broadcast %27 : vector<1x256xi32> to vector<8x256xi32>
    %30 = arith.cmpi eq, %28, %29 : vector<8x256xi32>
    %31 = arith.extui %30 : vector<8x256xi1> to vector<8x256xi32>
    %32 = arith.sitofp %31 : vector<8x256xi32> to vector<8x256xf32>
    %c1_i32_2 = arith.constant 1 : i32
    %33 = tpu.dynamic_rotate %32 by %c1_i32_2 dim 1 : vector<8x256xf32>, i32 -> vector<8x256xf32>
    %34 = vector.broadcast %10 : vector<1x256xf32> to vector<8x256xf32>
    %35 = arith.mulf %33, %34 : vector<8x256xf32>
    %c255_i32 = arith.constant 255 : i32
    %36 = tpu.dynamic_rotate %32 by %c255_i32 dim 1 : vector<8x256xf32>, i32 -> vector<8x256xf32>
    %37 = vector.broadcast %6 : vector<1x256xf32> to vector<8x256xf32>
    %38 = arith.mulf %36, %37 : vector<8x256xf32>
    %39 = tpu.concatenate %35, %32, %38 in 0 : vector<8x256xf32>, vector<8x256xf32>, vector<8x256xf32> -> vector<24x256xf32>
    %c0_3 = arith.constant 0 : index
    %c0_4 = arith.constant 0 : index
    %40 = vector.load %arg2[%c0_3, %c0_4] : memref<16x24xf32, #tpu.memory_space<vmem>>, vector<16x24xf32>
    %cst = arith.constant dense<0.000000e+00> : vector<16x256xf32>
    %41 = tpu.matmul %40, %39, %cst {dimension_numbers = #tpu.dot_dimension_numbers<[1], [0], [0], [1], [0, 0, 1, 1], [], []>} : vector<16x24xf32>, vector<24x256xf32>, vector<16x256xf32> -> vector<16x256xf32>
    %c0_5 = arith.constant 0 : index
    %c0_6 = arith.constant 0 : index
    %42 = vector.load %arg3[%c0_5, %c0_6] : memref<16x1xf32, #tpu.memory_space<vmem>>, vector<16x1xf32>
    %43 = vector.broadcast %42 : vector<16x1xf32> to vector<16x256xf32>
    %44 = arith.addf %41, %43 : vector<16x256xf32>
    %cst_7 = arith.constant 0.000000e+00 : f32
    %45 = vector.broadcast %cst_7 : f32 to vector<16x256xf32>
    %46 = arith.maximumf %44, %45 : vector<16x256xf32>
    %c2_i32_8 = arith.constant 2 : i32
    %47 = tpu.dynamic_rotate %46 by %c2_i32_8 dim 1 : vector<16x256xf32>, i32 -> vector<16x256xf32>
    %48 = vector.broadcast %18 : vector<1x256xf32> to vector<16x256xf32>
    %49 = arith.mulf %47, %48 : vector<16x256xf32>
    %c254_i32 = arith.constant 254 : i32
    %50 = tpu.dynamic_rotate %46 by %c254_i32 dim 1 : vector<16x256xf32>, i32 -> vector<16x256xf32>
    %51 = vector.broadcast %14 : vector<1x256xf32> to vector<16x256xf32>
    %52 = arith.mulf %50, %51 : vector<16x256xf32>
    %53 = tpu.concatenate %49, %46, %52 in 0 : vector<16x256xf32>, vector<16x256xf32>, vector<16x256xf32> -> vector<48x256xf32>
    %c0_9 = arith.constant 0 : index
    %c0_10 = arith.constant 0 : index
    %54 = vector.load %arg4[%c0_9, %c0_10] : memref<16x48xf32, #tpu.memory_space<vmem>>, vector<16x48xf32>
    %cst_11 = arith.constant dense<0.000000e+00> : vector<16x256xf32>
    %55 = tpu.matmul %54, %53, %cst_11 {dimension_numbers = #tpu.dot_dimension_numbers<[1], [0], [0], [1], [0, 0, 1, 1], [], []>} : vector<16x48xf32>, vector<48x256xf32>, vector<16x256xf32> -> vector<16x256xf32>
    %c0_12 = arith.constant 0 : index
    %c0_13 = arith.constant 0 : index
    %56 = vector.load %arg5[%c0_12, %c0_13] : memref<16x1xf32, #tpu.memory_space<vmem>>, vector<16x1xf32>
    %57 = vector.broadcast %56 : vector<16x1xf32> to vector<16x256xf32>
    %58 = arith.addf %55, %57 : vector<16x256xf32>
    %cst_14 = arith.constant 0.000000e+00 : f32
    %59 = vector.broadcast %cst_14 : f32 to vector<16x256xf32>
    %60 = arith.maximumf %58, %59 : vector<16x256xf32>
    %c4_i32_15 = arith.constant 4 : i32
    %61 = tpu.dynamic_rotate %60 by %c4_i32_15 dim 1 : vector<16x256xf32>, i32 -> vector<16x256xf32>
    %62 = vector.broadcast %26 : vector<1x256xf32> to vector<16x256xf32>
    %63 = arith.mulf %61, %62 : vector<16x256xf32>
    %c252_i32 = arith.constant 252 : i32
    %64 = tpu.dynamic_rotate %60 by %c252_i32 dim 1 : vector<16x256xf32>, i32 -> vector<16x256xf32>
    %65 = vector.broadcast %22 : vector<1x256xf32> to vector<16x256xf32>
    %66 = arith.mulf %64, %65 : vector<16x256xf32>
    %67 = tpu.concatenate %63, %60, %66 in 0 : vector<16x256xf32>, vector<16x256xf32>, vector<16x256xf32> -> vector<48x256xf32>
    %c0_16 = arith.constant 0 : index
    %c0_17 = arith.constant 0 : index
    %68 = vector.load %arg6[%c0_16, %c0_17] : memref<16x48xf32, #tpu.memory_space<vmem>>, vector<16x48xf32>
    %cst_18 = arith.constant dense<0.000000e+00> : vector<16x256xf32>
    %69 = tpu.matmul %68, %67, %cst_18 {dimension_numbers = #tpu.dot_dimension_numbers<[1], [0], [0], [1], [0, 0, 1, 1], [], []>} : vector<16x48xf32>, vector<48x256xf32>, vector<16x256xf32> -> vector<16x256xf32>
    %c0_19 = arith.constant 0 : index
    %c0_20 = arith.constant 0 : index
    %70 = vector.load %arg7[%c0_19, %c0_20] : memref<16x1xf32, #tpu.memory_space<vmem>>, vector<16x1xf32>
    %71 = vector.broadcast %70 : vector<16x1xf32> to vector<16x256xf32>
    %72 = arith.addf %69, %71 : vector<16x256xf32>
    %cst_21 = arith.constant 0.000000e+00 : f32
    %73 = vector.broadcast %cst_21 : f32 to vector<16x256xf32>
    %74 = arith.maximumf %72, %73 : vector<16x256xf32>
    %c0_22 = arith.constant 0 : index
    %c0_23 = arith.constant 0 : index
    %75 = vector.load %arg1[%c0_22, %c0_23] : memref<1x256xi32, #tpu.memory_space<vmem>>, vector<1x256xi32>
    %c0_i32 = arith.constant 0 : i32
    %76 = vector.broadcast %c0_i32 : i32 to vector<1x256xi32>
    %77 = arith.cmpi eq, %75, %76 : vector<1x256xi32>
    %78 = arith.extui %77 : vector<1x256xi1> to vector<1x256xi32>
    %79 = arith.sitofp %78 : vector<1x256xi32> to vector<1x256xf32>
    %80 = vector.broadcast %79 : vector<1x256xf32> to vector<16x256xf32>
    %81 = arith.mulf %74, %80 : vector<16x256xf32>
    %c0_24 = arith.constant 0 : index
    %c0_25 = arith.constant 0 : index
    %82 = vector.load %arg13[%c0_24, %c0_25] : memref<16x256xf32, #tpu.memory_space<vmem>>, vector<16x256xf32>
    tpu.vector_store %arg13[%c0_24, %c0_25], %81 {strides = array<i32>} : memref<16x256xf32, #tpu.memory_space<vmem>>, vector<16x256xf32>,
    %c0_26 = arith.constant 0 : index
    %c0_27 = arith.constant 0 : index
    %83 = vector.load %arg13[%c0_26, %c0_27] : memref<16x256xf32, #tpu.memory_space<vmem>>, vector<1x256xf32>
    %84 = vector.extract_strided_slice %83 {offsets = [0, 0], sizes = [1, 128], strides = [1, 1]} : vector<1x256xf32> to vector<1x128xf32>
    %c0_28 = arith.constant 0 : index
    %c0_29 = arith.constant 0 : index
    %85 = vector.load %arg14[%c0_28, %c0_29] : memref<2x2048xf32, #tpu.memory_space<vmem>>, vector<1x128xf32>
    tpu.vector_store %arg14[%c0_28, %c0_29], %84 {strides = array<i32>} : memref<2x2048xf32, #tpu.memory_space<vmem>>, vector<1x128xf32>,
    %86 = vector.extract_strided_slice %83 {offsets = [0, 128], sizes = [1, 128], strides = [1, 1]} : vector<1x256xf32> to vector<1x128xf32>
    %c1 = arith.constant 1 : index
    %c0_30 = arith.constant 0 : index
    %87 = vector.load %arg14[%c1, %c0_30] : memref<2x2048xf32, #tpu.memory_space<vmem>>, vector<1x128xf32>
    tpu.vector_store %arg14[%c1, %c0_30], %86 {strides = array<i32>} : memref<2x2048xf32, #tpu.memory_space<vmem>>, vector<1x128xf32>,
    %c1_31 = arith.constant 1 : index
    %c0_32 = arith.constant 0 : index
    %88 = vector.load %arg13[%c1_31, %c0_32] : memref<16x256xf32, #tpu.memory_space<vmem>>, vector<1x256xf32>
    %89 = vector.extract_strided_slice %88 {offsets = [0, 0], sizes = [1, 128], strides = [1, 1]} : vector<1x256xf32> to vector<1x128xf32>
    %c0_33 = arith.constant 0 : index
    %c128 = arith.constant 128 : index
    %90 = vector.load %arg14[%c0_33, %c128] : memref<2x2048xf32, #tpu.memory_space<vmem>>, vector<1x128xf32>
    tpu.vector_store %arg14[%c0_33, %c128], %89 {strides = array<i32>} : memref<2x2048xf32, #tpu.memory_space<vmem>>, vector<1x128xf32>,
    %91 = vector.extract_strided_slice %88 {offsets = [0, 128], sizes = [1, 128], strides = [1, 1]} : vector<1x256xf32> to vector<1x128xf32>
    %c1_34 = arith.constant 1 : index
    %c128_35 = arith.constant 128 : index
    %92 = vector.load %arg14[%c1_34, %c128_35] : memref<2x2048xf32, #tpu.memory_space<vmem>>, vector<1x128xf32>
    tpu.vector_store %arg14[%c1_34, %c128_35], %91 {strides = array<i32>} : memref<2x2048xf32, #tpu.memory_space<vmem>>, vector<1x128xf32>,
    %c2 = arith.constant 2 : index
    %c0_36 = arith.constant 0 : index
    %93 = vector.load %arg13[%c2, %c0_36] : memref<16x256xf32, #tpu.memory_space<vmem>>, vector<1x256xf32>
    %94 = vector.extract_strided_slice %93 {offsets = [0, 0], sizes = [1, 128], strides = [1, 1]} : vector<1x256xf32> to vector<1x128xf32>
    %c0_37 = arith.constant 0 : index
    %c256 = arith.constant 256 : index
    %95 = vector.load %arg14[%c0_37, %c256] : memref<2x2048xf32, #tpu.memory_space<vmem>>, vector<1x128xf32>
    tpu.vector_store %arg14[%c0_37, %c256], %94 {strides = array<i32>} : memref<2x2048xf32, #tpu.memory_space<vmem>>, vector<1x128xf32>,
    %96 = vector.extract_strided_slice %93 {offsets = [0, 128], sizes = [1, 128], strides = [1, 1]} : vector<1x256xf32> to vector<1x128xf32>
    %c1_38 = arith.constant 1 : index
    %c256_39 = arith.constant 256 : index
    %97 = vector.load %arg14[%c1_38, %c256_39] : memref<2x2048xf32, #tpu.memory_space<vmem>>, vector<1x128xf32>
    tpu.vector_store %arg14[%c1_38, %c256_39], %96 {strides = array<i32>} : memref<2x2048xf32, #tpu.memory_space<vmem>>, vector<1x128xf32>,
    %c3 = arith.constant 3 : index
    %c0_40 = arith.constant 0 : index
    %98 = vector.load %arg13[%c3, %c0_40] : memref<16x256xf32, #tpu.memory_space<vmem>>, vector<1x256xf32>
    %99 = vector.extract_strided_slice %98 {offsets = [0, 0], sizes = [1, 128], strides = [1, 1]} : vector<1x256xf32> to vector<1x128xf32>
    %c0_41 = arith.constant 0 : index
    %c384 = arith.constant 384 : index
    %100 = vector.load %arg14[%c0_41, %c384] : memref<2x2048xf32, #tpu.memory_space<vmem>>, vector<1x128xf32>
    tpu.vector_store %arg14[%c0_41, %c384], %99 {strides = array<i32>} : memref<2x2048xf32, #tpu.memory_space<vmem>>, vector<1x128xf32>,
    %101 = vector.extract_strided_slice %98 {offsets = [0, 128], sizes = [1, 128], strides = [1, 1]} : vector<1x256xf32> to vector<1x128xf32>
    %c1_42 = arith.constant 1 : index
    %c384_43 = arith.constant 384 : index
    %102 = vector.load %arg14[%c1_42, %c384_43] : memref<2x2048xf32, #tpu.memory_space<vmem>>, vector<1x128xf32>
    tpu.vector_store %arg14[%c1_42, %c384_43], %101 {strides = array<i32>} : memref<2x2048xf32, #tpu.memory_space<vmem>>, vector<1x128xf32>,
    %c4 = arith.constant 4 : index
    %c0_44 = arith.constant 0 : index
    %103 = vector.load %arg13[%c4, %c0_44] : memref<16x256xf32, #tpu.memory_space<vmem>>, vector<1x256xf32>
    %104 = vector.extract_strided_slice %103 {offsets = [0, 0], sizes = [1, 128], strides = [1, 1]} : vector<1x256xf32> to vector<1x128xf32>
    %c0_45 = arith.constant 0 : index
    %c512 = arith.constant 512 : index
    %105 = vector.load %arg14[%c0_45, %c512] : memref<2x2048xf32, #tpu.memory_space<vmem>>, vector<1x128xf32>
    tpu.vector_store %arg14[%c0_45, %c512], %104 {strides = array<i32>} : memref<2x2048xf32, #tpu.memory_space<vmem>>, vector<1x128xf32>,
    %106 = vector.extract_strided_slice %103 {offsets = [0, 128], sizes = [1, 128], strides = [1, 1]} : vector<1x256xf32> to vector<1x128xf32>
    %c1_46 = arith.constant 1 : index
    %c512_47 = arith.constant 512 : index
    %107 = vector.load %arg14[%c1_46, %c512_47] : memref<2x2048xf32, #tpu.memory_space<vmem>>, vector<1x128xf32>
    tpu.vector_store %arg14[%c1_46, %c512_47], %106 {strides = array<i32>} : memref<2x2048xf32, #tpu.memory_space<vmem>>, vector<1x128xf32>,
    %c5 = arith.constant 5 : index
    %c0_48 = arith.constant 0 : index
    %108 = vector.load %arg13[%c5, %c0_48] : memref<16x256xf32, #tpu.memory_space<vmem>>, vector<1x256xf32>
    %109 = vector.extract_strided_slice %108 {offsets = [0, 0], sizes = [1, 128], strides = [1, 1]} : vector<1x256xf32> to vector<1x128xf32>
    %c0_49 = arith.constant 0 : index
    %c640 = arith.constant 640 : index
    %110 = vector.load %arg14[%c0_49, %c640] : memref<2x2048xf32, #tpu.memory_space<vmem>>, vector<1x128xf32>
    tpu.vector_store %arg14[%c0_49, %c640], %109 {strides = array<i32>} : memref<2x2048xf32, #tpu.memory_space<vmem>>, vector<1x128xf32>,
    %111 = vector.extract_strided_slice %108 {offsets = [0, 128], sizes = [1, 128], strides = [1, 1]} : vector<1x256xf32> to vector<1x128xf32>
    %c1_50 = arith.constant 1 : index
    %c640_51 = arith.constant 640 : index
    %112 = vector.load %arg14[%c1_50, %c640_51] : memref<2x2048xf32, #tpu.memory_space<vmem>>, vector<1x128xf32>
    tpu.vector_store %arg14[%c1_50, %c640_51], %111 {strides = array<i32>} : memref<2x2048xf32, #tpu.memory_space<vmem>>, vector<1x128xf32>,
    %c6 = arith.constant 6 : index
    %c0_52 = arith.constant 0 : index
    %113 = vector.load %arg13[%c6, %c0_52] : memref<16x256xf32, #tpu.memory_space<vmem>>, vector<1x256xf32>
    %114 = vector.extract_strided_slice %113 {offsets = [0, 0], sizes = [1, 128], strides = [1, 1]} : vector<1x256xf32> to vector<1x128xf32>
    %c0_53 = arith.constant 0 : index
    %c768 = arith.constant 768 : index
    %115 = vector.load %arg14[%c0_53, %c768] : memref<2x2048xf32, #tpu.memory_space<vmem>>, vector<1x128xf32>
    tpu.vector_store %arg14[%c0_53, %c768], %114 {strides = array<i32>} : memref<2x2048xf32, #tpu.memory_space<vmem>>, vector<1x128xf32>,
    %116 = vector.extract_strided_slice %113 {offsets = [0, 128], sizes = [1, 128], strides = [1, 1]} : vector<1x256xf32> to vector<1x128xf32>
    %c1_54 = arith.constant 1 : index
    %c768_55 = arith.constant 768 : index
    %117 = vector.load %arg14[%c1_54, %c768_55] : memref<2x2048xf32, #tpu.memory_space<vmem>>, vector<1x128xf32>
    tpu.vector_store %arg14[%c1_54, %c768_55], %116 {strides = array<i32>} : memref<2x2048xf32, #tpu.memory_space<vmem>>, vector<1x128xf32>,
    %c7 = arith.constant 7 : index
    %c0_56 = arith.constant 0 : index
    %118 = vector.load %arg13[%c7, %c0_56] : memref<16x256xf32, #tpu.memory_space<vmem>>, vector<1x256xf32>
    %119 = vector.extract_strided_slice %118 {offsets = [0, 0], sizes = [1, 128], strides = [1, 1]} : vector<1x256xf32> to vector<1x128xf32>
    %c0_57 = arith.constant 0 : index
    %c896 = arith.constant 896 : index
    %120 = vector.load %arg14[%c0_57, %c896] : memref<2x2048xf32, #tpu.memory_space<vmem>>, vector<1x128xf32>
    tpu.vector_store %arg14[%c0_57, %c896], %119 {strides = array<i32>} : memref<2x2048xf32, #tpu.memory_space<vmem>>, vector<1x128xf32>,
    %121 = vector.extract_strided_slice %118 {offsets = [0, 128], sizes = [1, 128], strides = [1, 1]} : vector<1x256xf32> to vector<1x128xf32>
    %c1_58 = arith.constant 1 : index
    %c896_59 = arith.constant 896 : index
    %122 = vector.load %arg14[%c1_58, %c896_59] : memref<2x2048xf32, #tpu.memory_space<vmem>>, vector<1x128xf32>
    tpu.vector_store %arg14[%c1_58, %c896_59], %121 {strides = array<i32>} : memref<2x2048xf32, #tpu.memory_space<vmem>>, vector<1x128xf32>,
    %c8 = arith.constant 8 : index
    %c0_60 = arith.constant 0 : index
    %123 = vector.load %arg13[%c8, %c0_60] : memref<16x256xf32, #tpu.memory_space<vmem>>, vector<1x256xf32>
    %124 = vector.extract_strided_slice %123 {offsets = [0, 0], sizes = [1, 128], strides = [1, 1]} : vector<1x256xf32> to vector<1x128xf32>
    %c0_61 = arith.constant 0 : index
    %c1024 = arith.constant 1024 : index
    %125 = vector.load %arg14[%c0_61, %c1024] : memref<2x2048xf32, #tpu.memory_space<vmem>>, vector<1x128xf32>
    tpu.vector_store %arg14[%c0_61, %c1024], %124 {strides = array<i32>} : memref<2x2048xf32, #tpu.memory_space<vmem>>, vector<1x128xf32>,
    %126 = vector.extract_strided_slice %123 {offsets = [0, 128], sizes = [1, 128], strides = [1, 1]} : vector<1x256xf32> to vector<1x128xf32>
    %c1_62 = arith.constant 1 : index
    %c1024_63 = arith.constant 1024 : index
    %127 = vector.load %arg14[%c1_62, %c1024_63] : memref<2x2048xf32, #tpu.memory_space<vmem>>, vector<1x128xf32>
    tpu.vector_store %arg14[%c1_62, %c1024_63], %126 {strides = array<i32>} : memref<2x2048xf32, #tpu.memory_space<vmem>>, vector<1x128xf32>,
    %c9 = arith.constant 9 : index
    %c0_64 = arith.constant 0 : index
    %128 = vector.load %arg13[%c9, %c0_64] : memref<16x256xf32, #tpu.memory_space<vmem>>, vector<1x256xf32>
    %129 = vector.extract_strided_slice %128 {offsets = [0, 0], sizes = [1, 128], strides = [1, 1]} : vector<1x256xf32> to vector<1x128xf32>
    %c0_65 = arith.constant 0 : index
    %c1152 = arith.constant 1152 : index
    %130 = vector.load %arg14[%c0_65, %c1152] : memref<2x2048xf32, #tpu.memory_space<vmem>>, vector<1x128xf32>
    tpu.vector_store %arg14[%c0_65, %c1152], %129 {strides = array<i32>} : memref<2x2048xf32, #tpu.memory_space<vmem>>, vector<1x128xf32>,
    %131 = vector.extract_strided_slice %128 {offsets = [0, 128], sizes = [1, 128], strides = [1, 1]} : vector<1x256xf32> to vector<1x128xf32>
    %c1_66 = arith.constant 1 : index
    %c1152_67 = arith.constant 1152 : index
    %132 = vector.load %arg14[%c1_66, %c1152_67] : memref<2x2048xf32, #tpu.memory_space<vmem>>, vector<1x128xf32>
    tpu.vector_store %arg14[%c1_66, %c1152_67], %131 {strides = array<i32>} : memref<2x2048xf32, #tpu.memory_space<vmem>>, vector<1x128xf32>,
    %c10 = arith.constant 10 : index
    %c0_68 = arith.constant 0 : index
    %133 = vector.load %arg13[%c10, %c0_68] : memref<16x256xf32, #tpu.memory_space<vmem>>, vector<1x256xf32>
    %134 = vector.extract_strided_slice %133 {offsets = [0, 0], sizes = [1, 128], strides = [1, 1]} : vector<1x256xf32> to vector<1x128xf32>
    %c0_69 = arith.constant 0 : index
    %c1280 = arith.constant 1280 : index
    %135 = vector.load %arg14[%c0_69, %c1280] : memref<2x2048xf32, #tpu.memory_space<vmem>>, vector<1x128xf32>
    tpu.vector_store %arg14[%c0_69, %c1280], %134 {strides = array<i32>} : memref<2x2048xf32, #tpu.memory_space<vmem>>, vector<1x128xf32>,
    %136 = vector.extract_strided_slice %133 {offsets = [0, 128], sizes = [1, 128], strides = [1, 1]} : vector<1x256xf32> to vector<1x128xf32>
    %c1_70 = arith.constant 1 : index
    %c1280_71 = arith.constant 1280 : index
    %137 = vector.load %arg14[%c1_70, %c1280_71] : memref<2x2048xf32, #tpu.memory_space<vmem>>, vector<1x128xf32>
    tpu.vector_store %arg14[%c1_70, %c1280_71], %136 {strides = array<i32>} : memref<2x2048xf32, #tpu.memory_space<vmem>>, vector<1x128xf32>,
    %c11 = arith.constant 11 : index
    %c0_72 = arith.constant 0 : index
    %138 = vector.load %arg13[%c11, %c0_72] : memref<16x256xf32, #tpu.memory_space<vmem>>, vector<1x256xf32>
    %139 = vector.extract_strided_slice %138 {offsets = [0, 0], sizes = [1, 128], strides = [1, 1]} : vector<1x256xf32> to vector<1x128xf32>
    %c0_73 = arith.constant 0 : index
    %c1408 = arith.constant 1408 : index
    %140 = vector.load %arg14[%c0_73, %c1408] : memref<2x2048xf32, #tpu.memory_space<vmem>>, vector<1x128xf32>
    tpu.vector_store %arg14[%c0_73, %c1408], %139 {strides = array<i32>} : memref<2x2048xf32, #tpu.memory_space<vmem>>, vector<1x128xf32>,
    %141 = vector.extract_strided_slice %138 {offsets = [0, 128], sizes = [1, 128], strides = [1, 1]} : vector<1x256xf32> to vector<1x128xf32>
    %c1_74 = arith.constant 1 : index
    %c1408_75 = arith.constant 1408 : index
    %142 = vector.load %arg14[%c1_74, %c1408_75] : memref<2x2048xf32, #tpu.memory_space<vmem>>, vector<1x128xf32>
    tpu.vector_store %arg14[%c1_74, %c1408_75], %141 {strides = array<i32>} : memref<2x2048xf32, #tpu.memory_space<vmem>>, vector<1x128xf32>,
    %c12 = arith.constant 12 : index
    %c0_76 = arith.constant 0 : index
    %143 = vector.load %arg13[%c12, %c0_76] : memref<16x256xf32, #tpu.memory_space<vmem>>, vector<1x256xf32>
    %144 = vector.extract_strided_slice %143 {offsets = [0, 0], sizes = [1, 128], strides = [1, 1]} : vector<1x256xf32> to vector<1x128xf32>
    %c0_77 = arith.constant 0 : index
    %c1536 = arith.constant 1536 : index
    %145 = vector.load %arg14[%c0_77, %c1536] : memref<2x2048xf32, #tpu.memory_space<vmem>>, vector<1x128xf32>
    tpu.vector_store %arg14[%c0_77, %c1536], %144 {strides = array<i32>} : memref<2x2048xf32, #tpu.memory_space<vmem>>, vector<1x128xf32>,
    %146 = vector.extract_strided_slice %143 {offsets = [0, 128], sizes = [1, 128], strides = [1, 1]} : vector<1x256xf32> to vector<1x128xf32>
    %c1_78 = arith.constant 1 : index
    %c1536_79 = arith.constant 1536 : index
    %147 = vector.load %arg14[%c1_78, %c1536_79] : memref<2x2048xf32, #tpu.memory_space<vmem>>, vector<1x128xf32>
    tpu.vector_store %arg14[%c1_78, %c1536_79], %146 {strides = array<i32>} : memref<2x2048xf32, #tpu.memory_space<vmem>>, vector<1x128xf32>,
    %c13 = arith.constant 13 : index
    %c0_80 = arith.constant 0 : index
    %148 = vector.load %arg13[%c13, %c0_80] : memref<16x256xf32, #tpu.memory_space<vmem>>, vector<1x256xf32>
    %149 = vector.extract_strided_slice %148 {offsets = [0, 0], sizes = [1, 128], strides = [1, 1]} : vector<1x256xf32> to vector<1x128xf32>
    %c0_81 = arith.constant 0 : index
    %c1664 = arith.constant 1664 : index
    %150 = vector.load %arg14[%c0_81, %c1664] : memref<2x2048xf32, #tpu.memory_space<vmem>>, vector<1x128xf32>
    tpu.vector_store %arg14[%c0_81, %c1664], %149 {strides = array<i32>} : memref<2x2048xf32, #tpu.memory_space<vmem>>, vector<1x128xf32>,
    %151 = vector.extract_strided_slice %148 {offsets = [0, 128], sizes = [1, 128], strides = [1, 1]} : vector<1x256xf32> to vector<1x128xf32>
    %c1_82 = arith.constant 1 : index
    %c1664_83 = arith.constant 1664 : index
    %152 = vector.load %arg14[%c1_82, %c1664_83] : memref<2x2048xf32, #tpu.memory_space<vmem>>, vector<1x128xf32>
    tpu.vector_store %arg14[%c1_82, %c1664_83], %151 {strides = array<i32>} : memref<2x2048xf32, #tpu.memory_space<vmem>>, vector<1x128xf32>,
    %c14 = arith.constant 14 : index
    %c0_84 = arith.constant 0 : index
    %153 = vector.load %arg13[%c14, %c0_84] : memref<16x256xf32, #tpu.memory_space<vmem>>, vector<1x256xf32>
    %154 = vector.extract_strided_slice %153 {offsets = [0, 0], sizes = [1, 128], strides = [1, 1]} : vector<1x256xf32> to vector<1x128xf32>
    %c0_85 = arith.constant 0 : index
    %c1792 = arith.constant 1792 : index
    %155 = vector.load %arg14[%c0_85, %c1792] : memref<2x2048xf32, #tpu.memory_space<vmem>>, vector<1x128xf32>
    tpu.vector_store %arg14[%c0_85, %c1792], %154 {strides = array<i32>} : memref<2x2048xf32, #tpu.memory_space<vmem>>, vector<1x128xf32>,
    %156 = vector.extract_strided_slice %153 {offsets = [0, 128], sizes = [1, 128], strides = [1, 1]} : vector<1x256xf32> to vector<1x128xf32>
    %c1_86 = arith.constant 1 : index
    %c1792_87 = arith.constant 1792 : index
    %157 = vector.load %arg14[%c1_86, %c1792_87] : memref<2x2048xf32, #tpu.memory_space<vmem>>, vector<1x128xf32>
    tpu.vector_store %arg14[%c1_86, %c1792_87], %156 {strides = array<i32>} : memref<2x2048xf32, #tpu.memory_space<vmem>>, vector<1x128xf32>,
    %c15 = arith.constant 15 : index
    %c0_88 = arith.constant 0 : index
    %158 = vector.load %arg13[%c15, %c0_88] : memref<16x256xf32, #tpu.memory_space<vmem>>, vector<1x256xf32>
    %159 = vector.extract_strided_slice %158 {offsets = [0, 0], sizes = [1, 128], strides = [1, 1]} : vector<1x256xf32> to vector<1x128xf32>
    %c0_89 = arith.constant 0 : index
    %c1920 = arith.constant 1920 : index
    %160 = vector.load %arg14[%c0_89, %c1920] : memref<2x2048xf32, #tpu.memory_space<vmem>>, vector<1x128xf32>
    tpu.vector_store %arg14[%c0_89, %c1920], %159 {strides = array<i32>} : memref<2x2048xf32, #tpu.memory_space<vmem>>, vector<1x128xf32>,
    %161 = vector.extract_strided_slice %158 {offsets = [0, 128], sizes = [1, 128], strides = [1, 1]} : vector<1x256xf32> to vector<1x128xf32>
    %c1_90 = arith.constant 1 : index
    %c1920_91 = arith.constant 1920 : index
    %162 = vector.load %arg14[%c1_90, %c1920_91] : memref<2x2048xf32, #tpu.memory_space<vmem>>, vector<1x128xf32>
    tpu.vector_store %arg14[%c1_90, %c1920_91], %161 {strides = array<i32>} : memref<2x2048xf32, #tpu.memory_space<vmem>>, vector<1x128xf32>,
    %c0_92 = arith.constant 0 : index
    %c0_93 = arith.constant 0 : index
    %163 = vector.load %arg14[%c0_92, %c0_93] : memref<2x2048xf32, #tpu.memory_space<vmem>>, vector<2x2048xf32>
    %c0_94 = arith.constant 0 : index
    %c0_95 = arith.constant 0 : index
    %164 = vector.load %arg8[%c0_94, %c0_95] : memref<2048x16xf32, #tpu.memory_space<vmem>>, vector<2048x16xf32>
    %cst_96 = arith.constant dense<0.000000e+00> : vector<2x16xf32>
    %165 = tpu.matmul %163, %164, %cst_96 {dimension_numbers = #tpu.dot_dimension_numbers<[1], [0], [0], [1], [0, 0, 1, 1], [], []>} : vector<2x2048xf32>, vector<2048x16xf32>, vector<2x16xf32> -> vector<2x16xf32>
    %c0_97 = arith.constant 0 : index
    %c0_98 = arith.constant 0 : index
    %166 = vector.load %arg9[%c0_97, %c0_98] : memref<1x16xf32, #tpu.memory_space<vmem>>, vector<1x16xf32>
    %167 = vector.broadcast %166 : vector<1x16xf32> to vector<2x16xf32>
    %168 = arith.addf %165, %167 : vector<2x16xf32>
    %cst_99 = arith.constant 0.000000e+00 : f32
    %169 = vector.broadcast %cst_99 : f32 to vector<2x16xf32>
    %170 = arith.maximumf %168, %169 : vector<2x16xf32>
    %c0_100 = arith.constant 0 : index
    %c0_101 = arith.constant 0 : index
    %171 = vector.load %arg10[%c0_100, %c0_101] : memref<16x1xf32, #tpu.memory_space<vmem>>, vector<16x1xf32>
    %cst_102 = arith.constant dense<0.000000e+00> : vector<2x1xf32>
    %172 = tpu.matmul %170, %171, %cst_102 {dimension_numbers = #tpu.dot_dimension_numbers<[1], [0], [0], [1], [0, 0, 1, 1], [], []>} : vector<2x16xf32>, vector<16x1xf32>, vector<2x1xf32> -> vector<2x1xf32>
    %c0_103 = arith.constant 0 : index
    %c0_104 = arith.constant 0 : index
    %173 = vector.load %arg11[%c0_103, %c0_104] : memref<1x1xf32, #tpu.memory_space<vmem>>, vector<1x1xf32>
    %174 = vector.broadcast %173 : vector<1x1xf32> to vector<2x1xf32>
    %175 = arith.addf %172, %174 : vector<2x1xf32>
    %cst_105 = arith.constant 0.000000e+00 : f32
    %176 = vector.broadcast %cst_105 : f32 to vector<2x1xf32>
    %177 = arith.subf %176, %175 : vector<2x1xf32>
    %178 = math.exp %177 : vector<2x1xf32>
    %cst_106 = arith.constant 1.000000e+00 : f32
    %179 = vector.broadcast %cst_106 : f32 to vector<2x1xf32>
    %180 = arith.addf %179, %178 : vector<2x1xf32>
    %cst_107 = arith.constant 1.000000e+00 : f32
    %181 = vector.broadcast %cst_107 : f32 to vector<2x1xf32>
    %182 = arith.divf %181, %180 : vector<2x1xf32>
    %c0_108 = arith.constant 0 : index
    %c0_109 = arith.constant 0 : index
    %183 = vector.load %arg12[%c0_108, %c0_109] : memref<2x1xf32, #tpu.memory_space<vmem>>, vector<2x1xf32>
    tpu.vector_store %arg12[%c0_108, %c0_109], %182 {strides = array<i32>} : memref<2x1xf32, #tpu.memory_space<vmem>>, vector<2x1xf32>,
    return
  }
}

</mosaic_0001>

<llo_original>
// kernel: rna_conv1d_forward.1
$region0: #{rna_conv1d_forward.1}
  #allocation0 [shape = 'u32[]', space=smem, size = 0x4, offset = 0x4, fixed_abs, tag = 'smem constant byte address 0x4 - core index']
  #allocation1 [shape = 'u32[144,128]{1,0:T(1,128)}', space=vmem, size = 0x12000, scoped, tag = 'internal scratch']
  #allocation2 [shape = 'f32[16,256]{1,0:T(8,128)}', space=vmem, size = 0x4000, scoped, tag = 'scratch operand']
  #allocation3 [shape = 'f32[2,2048]{1,0:T(2,128)}', space=vmem, size = 0x4000, scoped, tag = 'scratch operand']
  #allocation4 [shape = 'f32[1,1]{1,0:T(1,128)S(1)}', space=vmem, size = 0x200, scoped, tag = 'scoped memory for rna_conv1d_forward.1']
  %s0 = inlined_call_operand.vmem [shape: s32[1,256], index: 0, kind: input, shape index: {}]
  %s1 = inlined_call_operand.vmem [shape: s32[1,256], index: 1, kind: input, shape index: {}]
  %s2 = inlined_call_operand.vmem [shape: f32[16,24], index: 2, kind: input, shape index: {}]
  %s3 = inlined_call_operand.vmem [shape: f32[16,1], index: 3, kind: input, shape index: {}]
  %s4 = inlined_call_operand.vmem [shape: f32[16,48], index: 4, kind: input, shape index: {}]
  %s5 = inlined_call_operand.vmem [shape: f32[16,1], index: 5, kind: input, shape index: {}]
  %s6 = inlined_call_operand.vmem [shape: f32[16,48], index: 6, kind: input, shape index: {}]
  %s7 = inlined_call_operand.vmem [shape: f32[16,1], index: 7, kind: input, shape index: {}]
  %s8 = inlined_call_operand.vmem [shape: f32[2048,16], index: 8, kind: input, shape index: {}]
  %s9 = inlined_call_operand.vmem [shape: f32[1,16], index: 9, kind: input, shape index: {}]
  %s10 = inlined_call_operand.vmem [shape: f32[16,1], index: 10, kind: input, shape index: {}]
  %s11 = inlined_call_operand.<no memory space> [shape: f32[1,1], index: 11, kind: input, shape index: {}]
  %s12 = inlined_call_operand.vmem [shape: f32[2,1], index: 12, kind: output, shape index: {}]
  %s13 = sld [smem:[#allocation0]]
  $region58: #{rna_conv1d_forward.1} parent=0
    _
  %s15 = ssub.s32 1, %s13
  %s16 = scalar_select 0, %s15, %s13
  %v17 = vstv %s11
  %18 = vst [vmem:[#allocation4] sm:$0x1] %v17
  // Predicated region
  $region2: #{rna_conv1d_forward.1} parent=0 // pred_check
    _
  $region3: #{rna_conv1d_forward.1} parent=0 // pred_check_branch
    %20 = sbr.rel (0) target = $region5
  $region4: #{rna_conv1d_forward.1} parent=0 // pred_region
    _
  $region5: #{rna_conv1d_forward.1} parent=0 // pred_fallthru
    _
  // Predicated region
  $region6: #{rna_conv1d_forward.1} parent=0 // pred_check
    _
  $region7: #{rna_conv1d_forward.1} parent=0 // pred_check_branch
    %22 = sbr.rel (0) target = $region9
  $region8: #{rna_conv1d_forward.1} parent=0 // pred_region
    _
  $region9: #{rna_conv1d_forward.1} parent=0 // pred_fallthru
    _
  // Predicated region
  $region10: #{rna_conv1d_forward.1} parent=0 // pred_check
    _
  $region11: #{rna_conv1d_forward.1} parent=0 // pred_check_branch
    %24 = sbr.rel (0) target = $region13
  $region12: #{rna_conv1d_forward.1} parent=0 // pred_region
    _
  $region13: #{rna_conv1d_forward.1} parent=0 // pred_fallthru
    _
  // Predicated region
  $region14: #{rna_conv1d_forward.1} parent=0 // pred_check
    _
  $region15: #{rna_conv1d_forward.1} parent=0 // pred_check_branch
    %26 = sbr.rel (0) target = $region17
  $region16: #{rna_conv1d_forward.1} parent=0 // pred_region
    _
  $region17: #{rna_conv1d_forward.1} parent=0 // pred_fallthru
    _
  // Predicated region
  $region18: #{rna_conv1d_forward.1} parent=0 // pred_check
    _
  $region19: #{rna_conv1d_forward.1} parent=0 // pred_check_branch
    %28 = sbr.rel (0) target = $region21
  $region20: #{rna_conv1d_forward.1} parent=0 // pred_region
    _
  $region21: #{rna_conv1d_forward.1} parent=0 // pred_fallthru
    _
  // Predicated region
  $region22: #{rna_conv1d_forward.1} parent=0 // pred_check
    _
  $region23: #{rna_conv1d_forward.1} parent=0 // pred_check_branch
    %30 = sbr.rel (0) target = $region25
  $region24: #{rna_conv1d_forward.1} parent=0 // pred_region
    _
  $region25: #{rna_conv1d_forward.1} parent=0 // pred_fallthru
    _
  // Predicated region
  $region26: #{rna_conv1d_forward.1} parent=0 // pred_check
    _
  $region27: #{rna_conv1d_forward.1} parent=0 // pred_check_branch
    %32 = sbr.rel (0) target = $region29
  $region28: #{rna_conv1d_forward.1} parent=0 // pred_region
    _
  $region29: #{rna_conv1d_forward.1} parent=0 // pred_fallthru
    _
  // Predicated region
  $region30: #{rna_conv1d_forward.1} parent=0 // pred_check
    _
  $region31: #{rna_conv1d_forward.1} parent=0 // pred_check_branch
    %34 = sbr.rel (0) target = $region33
  $region32: #{rna_conv1d_forward.1} parent=0 // pred_region
    _
  $region33: #{rna_conv1d_forward.1} parent=0 // pred_fallthru
    _
  // Predicated region
  $region34: #{rna_conv1d_forward.1} parent=0 // pred_check
    _
  $region35: #{rna_conv1d_forward.1} parent=0 // pred_check_branch
    %36 = sbr.rel (0) target = $region37
  $region36: #{rna_conv1d_forward.1} parent=0 // pred_region
    _
  $region37: #{rna_conv1d_forward.1} parent=0 // pred_fallthru
    _
  // Predicated region
  $region38: #{rna_conv1d_forward.1} parent=0 // pred_check
    _
  $region39: #{rna_conv1d_forward.1} parent=0 // pred_check_branch
    %38 = sbr.rel (0) target = $region41
  $region40: #{rna_conv1d_forward.1} parent=0 // pred_region
    _
  $region41: #{rna_conv1d_forward.1} parent=0 // pred_fallthru
    _
  // Predicated region
  $region42: #{rna_conv1d_forward.1} parent=0 // pred_check
    _
  $region43: #{rna_conv1d_forward.1} parent=0 // pred_check_branch
    %40 = sbr.rel (0) target = $region45
  $region44: #{rna_conv1d_forward.1} parent=0 // pred_region
    _
  $region45: #{rna_conv1d_forward.1} parent=0 // pred_fallthru
    _
  // Predicated region
  $region46: #{rna_conv1d_forward.1} parent=0 // pred_check
    _
  $region47: #{rna_conv1d_forward.1} parent=0 // pred_check_branch
    %42 = sbr.rel (0) target = $region49
  $region48: #{rna_conv1d_forward.1} parent=0 // pred_region
    _
  $region49: #{rna_conv1d_forward.1} parent=0 // pred_fallthru
    _
  %v43 = vlaneseq
  %v44 = vand.u32 %v43, 127
  %v45 = vadd.s32 %v44, 128
  %v46 = vand.u32 %v44, 127
  %v47 = vand.u32 %v45, 127
  %vm48 = vcmp.lt.s32.totalorder %v46, 127
  %vm49 = vcmp.lt.s32.totalorder %v47, 127
  %v50 = vsel %vm48, 1, 0
  %v51 = vsel %vm49, 1, 0
  %v52 = vcvt.s32.f32 %v50
  %v53 = vcvt.s32.f32 %v51
  %vm54 = vcmp.ge.s32.totalorder %v46, 1
  %vm55 = vcmp.ge.s32.totalorder %v47, 1
  %v56 = vsel %vm54, 1, 0
  %v57 = vsel %vm55, 1, 0
  %v58 = vcvt.s32.f32 %v56
  %v59 = vcvt.s32.f32 %v57
  %vm60 = vcmp.lt.s32.totalorder %v46, 126
  %vm61 = vcmp.lt.s32.totalorder %v47, 126
  %v62 = vsel %vm60, 1, 0
  %v63 = vsel %vm61, 1, 0
  %v64 = vcvt.s32.f32 %v62
  %v65 = vcvt.s32.f32 %v63
  %vm66 = vcmp.ge.s32.totalorder %v46, 2
  %vm67 = vcmp.ge.s32.totalorder %v47, 2
  %v68 = vsel %vm66, 1, 0
  %v69 = vsel %vm67, 1, 0
  %v70 = vcvt.s32.f32 %v68
  %v71 = vcvt.s32.f32 %v69
  %vm72 = vcmp.lt.s32.totalorder %v46, 124
  %vm73 = vcmp.lt.s32.totalorder %v47, 124
  %v74 = vsel %vm72, 1, 0
  %v75 = vsel %vm73, 1, 0
  %v76 = vcvt.s32.f32 %v74
  %v77 = vcvt.s32.f32 %v75
  %vm78 = vcmp.ge.s32.totalorder %v46, 4
  %vm79 = vcmp.ge.s32.totalorder %v47, 4
  %v80 = vsel %vm78, 1, 0
  %v81 = vsel %vm79, 1, 0
  %v82 = vcvt.s32.f32 %v80
  %v83 = vcvt.s32.f32 %v81
  %v84 = vld [vmem:[%s0] sm:$0x3]
  %v85 = vlaneseq
  %v86 = vshrl.u32 %v85, 7
  %v87 = vlaneseq
  %v88 = vshrl.u32 %v87, 7
  %v89 = vsub.s32 0, %v88
  %v90 = vrot.slane %v84, %v89
  %v91 = vlaneseq
  %v92 = vshrl.u32 %v91, 7
  %v93 = vsub.s32 1, %v92
  %v94 = vrot.slane %v84, %v93
  %vm95 = vcmp.eq.s32.totalorder %v86, %v90
  %vm96 = vcmp.eq.s32.totalorder %v86, %v94
  %v97 = vsel %vm95, 1, 0
  %v98 = vsel %vm96, 1, 0
  %v99 = vcvt.s32.f32 %v97
  %v100 = vcvt.s32.f32 %v98
  %101 = vrot.lane.b32.xlu0 %v99, 1
  %v102 = vpop.permute.xlu0 %101
  %103 = vrot.lane.b32.xlu0 %v100, 1
  %v104 = vpop.permute.xlu0 %103
  %vm105 = vcmp.lt.s32.totalorder %v44, 1
  %v106 = vsel %vm105, %v102, %v104
  %v107 = vsel %vm105, %v104, %v102
  %v108 = vmul.f32 %v107, %v58
  %v109 = vmul.f32 %v106, %v59
  %110 = vrot.lane.b32.xlu0 %v99, 127
  %v111 = vpop.permute.xlu0 %110
  %112 = vrot.lane.b32.xlu0 %v100, 127
  %v113 = vpop.permute.xlu0 %112
  %vm114 = vcmp.lt.s32.totalorder %v44, 127
  %v115 = vsel %vm114, %v111, %v113
  %v116 = vsel %vm114, %v113, %v111
  %v117 = vmul.f32 %v115, %v52
  %v118 = vmul.f32 %v116, %v53
  %v119 = vld [vmem:[%s2] sm:$0xff]
  %v120 = vld [vmem:[%s2 + $0x8] sm:$0xff]
  %v121 = vld [vmem:[%s3] sm:$0xff]
  %v122 = vld [vmem:[%s3 + $0x8] sm:$0xff]
  %124 = vset.pattern.permute.xlu0 0
  %125 = vperm.xlu0 %124, %v121
  %v126 = vpop.permute.xlu0 %125
  %129 = vset.pattern.permute.xlu0 0
  %130 = vperm.xlu0 %129, %v122
  %v131 = vpop.permute.xlu0 %130
  %vm133 = vcmask 195584
  %v135 = vsel %vm133, %v119, 0
  %v138 = vsel %vm133, %v120, 0
  %140 = vmatprep.subr.mxu0 %v109
  %141 = vmatpush1.msra.mxu0 %v108
  %142 = vmatprep.subr.mxu0 %v100
  %143 = vmatpush1.msra.mxu0 %v99
  %144 = vmatprep.subr.mxu0 %v118
  %145 = vmatpush1.msra.mxu0 %v117
  %146 = vmatprep.subr.mxu0 0.0
  %147 = vmatpush1.msra.mxu0 0.0
  %148 = vmatprep.subr.mxu0 0.0
  %149 = vmatpush1.msra.mxu0 0.0
  %150 = vmatprep.subr.mxu0 0.0
  %151 = vmatpush1.msra.mxu0 0.0
  %152 = vmatprep.subr.mxu0 0.0
  %153 = vmatpush1.msra.mxu0 0.0
  %154 = vmatprep.subr.mxu0 0.0
  %155 = vmatpush1.msra.mxu0 0.0
  %156 = vmatprep.subr.mxu0 0.0
  %157 = vmatpush1.msra.mxu0 0.0
  %158 = vmatprep.subr.mxu0 0.0
  %159 = vmatpush1.msra.mxu0 0.0
  %160 = vmatprep.subr.mxu0 0.0
  %161 = vmatpush1.msra.mxu0 0.0
  %162 = vmatprep.subr.mxu0 0.0
  %163 = vmatpush1.msra.mxu0 0.0
  %164 = vmatprep.subr.mxu0 0.0
  %165 = vmatpush1.msra.mxu0 0.0
  %166 = vmatprep.subr.mxu0 0.0
  %167 = vmatpush1.msra.mxu0 0.0
  %168 = vmatprep.subr.mxu0 0.0
  %169 = vmatpush1.msra.mxu0 0.0
  %170 = vmatprep.subr.mxu0 0.0
  %171 = vmatpush1.msra.mxu0 0.0
  %172 = vmatprep.subr.mxu0 0.0
  %173 = vmatpush1.msra.mxu0 0.0
  %174 = vmatprep.subr.mxu0 0.0
  %175 = vmatpush1.msra.mxu0 0.0
  %176 = vmatprep.subr.mxu0 0.0
  %177 = vmatpush1.msra.mxu0 0.0
  %178 = vmatprep.subr.mxu0 0.0
  %179 = vmatpush1.msra.mxu0 0.0
  %180 = vmatprep.subr.mxu0 0.0
  %181 = vmatpush1.msra.mxu0 0.0
  %182 = vmatprep.subr.mxu0 0.0
  %183 = vmatpush1.msra.mxu0 0.0
  %184 = vmatprep.subr.mxu0 0.0
  %185 = vmatpush1.msra.mxu0 0.0
  %186 = vmatprep.subr.mxu0 0.0
  %187 = vmatpush1.msra.mxu0 0.0
  %188 = vmatprep.subr.mxu0 0.0
  %189 = vmatpush1.msra.mxu0 0.0
  %190 = vmatprep.subr.mxu0 0.0
  %191 = vmatpush1.msra.mxu0 0.0
  %192 = vmatprep.subr.mxu0 0.0
  %193 = vmatpush1.msra.mxu0 0.0
  %194 = vmatprep.subr.mxu0 0.0
  %195 = vmatpush1.msra.mxu0 0.0
  %196 = vmatprep.subr.mxu0 0.0
  %197 = vmatpush1.msra.mxu0 0.0
  %198 = vmatprep.subr.mxu0 0.0
  %199 = vmatpush1.msra.mxu0 0.0
  %200 = vmatprep.subr.mxu0 0.0
  %201 = vmatpush1.msra.mxu0 0.0
  %202 = vmatprep.subr.mxu0 0.0
  %203 = vmatpush1.msra.mxu0 0.0
  %204 = vmatprep.mubr.f32.mxu0 0.0
  %205 = vmatmul.mubr.f32.gmra.mrb[0].mxu0 %v135
  %v206 = vpop.f32.mrb[0].mxu0
  %v207 = vadd.f32 %v126, %v206
  %v208 = vpop.f32.mrb[0].mxu0
  %v209 = vadd.f32 %v126, %v208
  %210 = vmatprep.mubr.f32.mxu0 0.0
  %211 = vmatmul.mubr.f32.gmra.mrb[0].mxu0 %v138
  %v212 = vpop.f32.mrb[0].mxu0
  %v213 = vadd.f32 %v131, %v212
  %v214 = vpop.f32.mrb[0].mxu0
  %v215 = vadd.f32 %v131, %v214
  %216 = vdwg.mxu0
  %v217 = vmax.f32 %v207, 0.0
  %v218 = vmax.f32 %v209, 0.0
  %v219 = vmax.f32 %v213, 0.0
  %v220 = vmax.f32 %v215, 0.0
  %221 = vrot.lane.b32.xlu0 %v217, 2
  %v222 = vpop.permute.xlu0 %221
  %223 = vrot.lane.b32.xlu0 %v219, 2
  %v224 = vpop.permute.xlu0 %223
  %225 = vrot.lane.b32.xlu0 %v218, 2
  %v226 = vpop.permute.xlu0 %225
  %227 = vrot.lane.b32.xlu0 %v220, 2
  %v228 = vpop.permute.xlu0 %227
  %vm229 = vcmp.lt.s32.totalorder %v44, 2
  %v230 = vsel %vm229, %v222, %v226
  %v231 = vsel %vm229, %v224, %v228
  %v232 = vsel %vm229, %v226, %v222
  %v233 = vsel %vm229, %v228, %v224
  %v234 = vmul.f32 %v232, %v70
  %v235 = vmul.f32 %v230, %v71
  %v236 = vmul.f32 %v233, %v70
  %v237 = vmul.f32 %v231, %v71
  %238 = vrot.lane.b32.xlu0 %v217, 126
  %v239 = vpop.permute.xlu0 %238
  %240 = vrot.lane.b32.xlu0 %v219, 126
  %v241 = vpop.permute.xlu0 %240
  %242 = vrot.lane.b32.xlu0 %v218, 126
  %v243 = vpop.permute.xlu0 %242
  %244 = vrot.lane.b32.xlu0 %v220, 126
  %v245 = vpop.permute.xlu0 %244
  %vm246 = vcmp.lt.s32.totalorder %v44, 126
  %v247 = vsel %vm246, %v239, %v243
  %v248 = vsel %vm246, %v241, %v245
  %v249 = vsel %vm246, %v243, %v239
  %v250 = vsel %vm246, %v245, %v241
  %v251 = vmul.f32 %v247, %v64
  %v252 = vmul.f32 %v249, %v65
  %v253 = vmul.f32 %v248, %v64
  %v254 = vmul.f32 %v250, %v65
  %v255 = vld [vmem:[%s4] sm:$0xff]
  %v256 = vld [vmem:[%s4 + $0x8] sm:$0xff]
  %v257 = vld [vmem:[%s5] sm:$0xff]
  %v258 = vld [vmem:[%s5 + $0x8] sm:$0xff]
  %260 = vset.pattern.permute.xlu0 0
  %261 = vperm.xlu0 %260, %v257
  %v262 = vpop.permute.xlu0 %261
  %265 = vset.pattern.permute.xlu0 0
  %266 = vperm.xlu0 %265, %v258
  %v267 = vpop.permute.xlu0 %266
  %vm269 = vcmask 392192
  %v271 = vsel %vm269, %v255, 0
  %v274 = vsel %vm269, %v256, 0
  %276 = vmatprep.subr.mxu0 %v235
  %277 = vmatpush1.msra.mxu0 %v234
  %278 = vmatprep.subr.mxu0 %v237
  %279 = vmatpush1.msra.mxu0 %v236
  %280 = vmatprep.subr.mxu0 %v218
  %281 = vmatpush1.msra.mxu0 %v217
  %282 = vmatprep.subr.mxu0 %v220
  %283 = vmatpush1.msra.mxu0 %v219
  %284 = vmatprep.subr.mxu0 %v252
  %285 = vmatpush1.msra.mxu0 %v251
  %286 = vmatprep.subr.mxu0 %v254
  %287 = vmatpush1.msra.mxu0 %v253
  %288 = vmatprep.subr.mxu0 0.0
  %289 = vmatpush1.msra.mxu0 0.0
  %290 = vmatprep.subr.mxu0 0.0
  %291 = vmatpush1.msra.mxu0 0.0
  %292 = vmatprep.subr.mxu0 0.0
  %293 = vmatpush1.msra.mxu0 0.0
  %294 = vmatprep.subr.mxu0 0.0
  %295 = vmatpush1.msra.mxu0 0.0
  %296 = vmatprep.subr.mxu0 0.0
  %297 = vmatpush1.msra.mxu0 0.0
  %298 = vmatprep.subr.mxu0 0.0
  %299 = vmatpush1.msra.mxu0 0.0
  %300 = vmatprep.subr.mxu0 0.0
  %301 = vmatpush1.msra.mxu0 0.0
  %302 = vmatprep.subr.mxu0 0.0
  %303 = vmatpush1.msra.mxu0 0.0
  %304 = vmatprep.subr.mxu0 0.0
  %305 = vmatpush1.msra.mxu0 0.0
  %306 = vmatprep.subr.mxu0 0.0
  %307 = vmatpush1.msra.mxu0 0.0
  %308 = vmatprep.subr.mxu0 0.0
  %309 = vmatpush1.msra.mxu0 0.0
  %310 = vmatprep.subr.mxu0 0.0
  %311 = vmatpush1.msra.mxu0 0.0
  %312 = vmatprep.subr.mxu0 0.0
  %313 = vmatpush1.msra.mxu0 0.0
  %314 = vmatprep.subr.mxu0 0.0
  %315 = vmatpush1.msra.mxu0 0.0
  %316 = vmatprep.subr.mxu0 0.0
  %317 = vmatpush1.msra.mxu0 0.0
  %318 = vmatprep.subr.mxu0 0.0
  %319 = vmatpush1.msra.mxu0 0.0
  %320 = vmatprep.subr.mxu0 0.0
  %321 = vmatpush1.msra.mxu0 0.0
  %322 = vmatprep.subr.mxu0 0.0
  %323 = vmatpush1.msra.mxu0 0.0
  %324 = vmatprep.subr.mxu0 0.0
  %325 = vmatpush1.msra.mxu0 0.0
  %326 = vmatprep.subr.mxu0 0.0
  %327 = vmatpush1.msra.mxu0 0.0
  %328 = vmatprep.subr.mxu0 0.0
  %329 = vmatpush1.msra.mxu0 0.0
  %330 = vmatprep.subr.mxu0 0.0
  %331 = vmatpush1.msra.mxu0 0.0
  %332 = vmatprep.subr.mxu0 0.0
  %333 = vmatpush1.msra.mxu0 0.0
  %334 = vmatprep.subr.mxu0 0.0
  %335 = vmatpush1.msra.mxu0 0.0
  %336 = vmatprep.subr.mxu0 0.0
  %337 = vmatpush1.msra.mxu0 0.0
  %338 = vmatprep.subr.mxu0 0.0
  %339 = vmatpush1.msra.mxu0 0.0
  %340 = vmatprep.mubr.f32.mxu0 0.0
  %341 = vmatmul.mubr.f32.gmra.mrb[0].mxu0 %v271
  %v342 = vpop.f32.mrb[0].mxu0
  %v343 = vadd.f32 %v262, %v342
  %v344 = vpop.f32.mrb[0].mxu0
  %v345 = vadd.f32 %v262, %v344
  %346 = vmatprep.mubr.f32.mxu0 0.0
  %347 = vmatmul.mubr.f32.gmra.mrb[0].mxu0 %v274
  %v348 = vpop.f32.mrb[0].mxu0
  %v349 = vadd.f32 %v267, %v348
  %v350 = vpop.f32.mrb[0].mxu0
  %v351 = vadd.f32 %v267, %v350
  %352 = vdwg.mxu0
  %v353 = vmax.f32 %v343, 0.0
  %v354 = vmax.f32 %v345, 0.0
  %v355 = vmax.f32 %v349, 0.0
  %v356 = vmax.f32 %v351, 0.0
  %357 = vrot.lane.b32.xlu0 %v353, 4
  %v358 = vpop.permute.xlu0 %357
  %359 = vrot.lane.b32.xlu0 %v355, 4
  %v360 = vpop.permute.xlu0 %359
  %361 = vrot.lane.b32.xlu0 %v354, 4
  %v362 = vpop.permute.xlu0 %361
  %363 = vrot.lane.b32.xlu0 %v356, 4
  %v364 = vpop.permute.xlu0 %363
  %vm365 = vcmp.lt.s32.totalorder %v44, 4
  %v366 = vsel %vm365, %v358, %v362
  %v367 = vsel %vm365, %v360, %v364
  %v368 = vsel %vm365, %v362, %v358
  %v369 = vsel %vm365, %v364, %v360
  %v370 = vmul.f32 %v368, %v82
  %v371 = vmul.f32 %v366, %v83
  %v372 = vmul.f32 %v369, %v82
  %v373 = vmul.f32 %v367, %v83
  %374 = vrot.lane.b32.xlu0 %v353, 124
  %v375 = vpop.permute.xlu0 %374
  %376 = vrot.lane.b32.xlu0 %v355, 124
  %v377 = vpop.permute.xlu0 %376
  %378 = vrot.lane.b32.xlu0 %v354, 124
  %v379 = vpop.permute.xlu0 %378
  %380 = vrot.lane.b32.xlu0 %v356, 124
  %v381 = vpop.permute.xlu0 %380
  %vm382 = vcmp.lt.s32.totalorder %v44, 124
  %v383 = vsel %vm382, %v375, %v379
  %v384 = vsel %vm382, %v377, %v381
  %v385 = vsel %vm382, %v379, %v375
  %v386 = vsel %vm382, %v381, %v377
  %v387 = vmul.f32 %v383, %v76
  %v388 = vmul.f32 %v385, %v77
  %v389 = vmul.f32 %v384, %v76
  %v390 = vmul.f32 %v386, %v77
  %v391 = vld [vmem:[%s6] sm:$0xff]
  %v392 = vld [vmem:[%s6 + $0x8] sm:$0xff]
  %v393 = vld [vmem:[%s7] sm:$0xff]
  %v394 = vld [vmem:[%s7 + $0x8] sm:$0xff]
  %396 = vset.pattern.permute.xlu0 0
  %397 = vperm.xlu0 %396, %v393
  %v398 = vpop.permute.xlu0 %397
  %401 = vset.pattern.permute.xlu0 0
  %402 = vperm.xlu0 %401, %v394
  %v403 = vpop.permute.xlu0 %402
  %v406 = vsel %vm269, %v391, 0
  %v409 = vsel %vm269, %v392, 0
  %411 = vmatprep.subr.mxu0 %v371
  %412 = vmatpush1.msra.mxu0 %v370
  %413 = vmatprep.subr.mxu0 %v373
  %414 = vmatpush1.msra.mxu0 %v372
  %415 = vmatprep.subr.mxu0 %v354
  %416 = vmatpush1.msra.mxu0 %v353
  %417 = vmatprep.subr.mxu0 %v356
  %418 = vmatpush1.msra.mxu0 %v355
  %419 = vmatprep.subr.mxu0 %v388
  %420 = vmatpush1.msra.mxu0 %v387
  %421 = vmatprep.subr.mxu0 %v390
  %422 = vmatpush1.msra.mxu0 %v389
  %423 = vmatprep.subr.mxu0 0.0
  %424 = vmatpush1.msra.mxu0 0.0
  %425 = vmatprep.subr.mxu0 0.0
  %426 = vmatpush1.msra.mxu0 0.0
  %427 = vmatprep.subr.mxu0 0.0
  %428 = vmatpush1.msra.mxu0 0.0
  %429 = vmatprep.subr.mxu0 0.0
  %430 = vmatpush1.msra.mxu0 0.0
  %431 = vmatprep.subr.mxu0 0.0
  %432 = vmatpush1.msra.mxu0 0.0
  %433 = vmatprep.subr.mxu0 0.0
  %434 = vmatpush1.msra.mxu0 0.0
  %435 = vmatprep.subr.mxu0 0.0
  %436 = vmatpush1.msra.mxu0 0.0
  %437 = vmatprep.subr.mxu0 0.0
  %438 = vmatpush1.msra.mxu0 0.0
  %439 = vmatprep.subr.mxu0 0.0
  %440 = vmatpush1.msra.mxu0 0.0
  %441 = vmatprep.subr.mxu0 0.0
  %442 = vmatpush1.msra.mxu0 0.0
  %443 = vmatprep.subr.mxu0 0.0
  %444 = vmatpush1.msra.mxu0 0.0
  %445 = vmatprep.subr.mxu0 0.0
  %446 = vmatpush1.msra.mxu0 0.0
  %447 = vmatprep.subr.mxu0 0.0
  %448 = vmatpush1.msra.mxu0 0.0
  %449 = vmatprep.subr.mxu0 0.0
  %450 = vmatpush1.msra.mxu0 0.0
  %451 = vmatprep.subr.mxu0 0.0
  %452 = vmatpush1.msra.mxu0 0.0
  %453 = vmatprep.subr.mxu0 0.0
  %454 = vmatpush1.msra.mxu0 0.0
  %455 = vmatprep.subr.mxu0 0.0
  %456 = vmatpush1.msra.mxu0 0.0
  %457 = vmatprep.subr.mxu0 0.0
  %458 = vmatpush1.msra.mxu0 0.0
  %459 = vmatprep.subr.mxu0 0.0
  %460 = vmatpush1.msra.mxu0 0.0
  %461 = vmatprep.subr.mxu0 0.0
  %462 = vmatpush1.msra.mxu0 0.0
  %463 = vmatprep.subr.mxu0 0.0
  %464 = vmatpush1.msra.mxu0 0.0
  %465 = vmatprep.subr.mxu0 0.0
  %466 = vmatpush1.msra.mxu0 0.0
  %467 = vmatprep.subr.mxu0 0.0
  %468 = vmatpush1.msra.mxu0 0.0
  %469 = vmatprep.subr.mxu0 0.0
  %470 = vmatpush1.msra.mxu0 0.0
  %471 = vmatprep.subr.mxu0 0.0
  %472 = vmatpush1.msra.mxu0 0.0
  %473 = vmatprep.subr.mxu0 0.0
  %474 = vmatpush1.msra.mxu0 0.0
  %475 = vmatprep.mubr.f32.mxu0 0.0
  %476 = vmatmul.mubr.f32.gmra.mrb[0].mxu0 %v406
  %v477 = vpop.f32.mrb[0].mxu0
  %v478 = vadd.f32 %v398, %v477
  %v479 = vpop.f32.mrb[0].mxu0
  %v480 = vadd.f32 %v398, %v479
  %481 = vmatprep.mubr.f32.mxu0 0.0
  %482 = vmatmul.mubr.f32.gmra.mrb[0].mxu0 %v409
  %v483 = vpop.f32.mrb[0].mxu0
  %v484 = vadd.f32 %v403, %v483
  %v485 = vpop.f32.mrb[0].mxu0
  %v486 = vadd.f32 %v403, %v485
  %487 = vdwg.mxu0
  %v488 = vmax.f32 %v478, 0.0
  %v489 = vmax.f32 %v480, 0.0
  %v490 = vmax.f32 %v484, 0.0
  %v491 = vmax.f32 %v486, 0.0
  %v492 = vld [vmem:[%s1] sm:$0x3]
  %vm493 = vcmp.eq.s32.totalorder %v492, 0
  %v494 = vsel %vm493, 1, 0
  %v495 = vcvt.s32.f32 %v494
  %v497 = vlaneseq
  %v498 = vshrl.u32 %v497, 7
  %v499 = vsub.s32 0, %v498
  %v500 = vrot.slane %v495, %v499
  %v501 = vlaneseq
  %v502 = vshrl.u32 %v501, 7
  %v503 = vsub.s32 1, %v502
  %v504 = vrot.slane %v495, %v503
  %v507 = vmul.f32 %v488, %v500
  %v508 = vmul.f32 %v489, %v504
  %v509 = vmul.f32 %v490, %v500
  %v510 = vmul.f32 %v491, %v504
  %511 = vst [vmem:[#allocation2] sm:$0xff] %v507
  %512 = vst [vmem:[#allocation2 + $0x8] sm:$0xff] %v508
  %513 = vst [vmem:[#allocation2 + $0x10] sm:$0xff] %v509
  %514 = vst [vmem:[#allocation2 + $0x18] sm:$0xff] %v510
  %v515 = vld [vmem:[#allocation2] ss:$8 sm:$0x3]
  %516 = vst [vmem:[#allocation3] sm:$0x1] %v515
  %v519 = vunpack.c.l.s4 857870592
  %v520 = vunpack.c.0.s8 %v519
  %v521 = vlaneseq
  %v522 = vshrl.u32 %v521, 7
  %v523 = vsub.s32 %v520, %v522
  %v524 = vrot.slane %v515, %v523
  %v525 = vrot.slane %v524, 2
  %527 = vst [vmem:[#allocation3 + $0x1] sm:$0x1] %v525
  %s528 = scalar_lea.vmem [#allocation2], 1
  %v529 = vld [vmem:[%s528] ss:$8 sm:$0x3]
  %530 = vst [vmem:[#allocation3 + $0x2] sm:$0x1] %v529
  %v533 = vunpack.c.l.s4 857870592
  %v534 = vunpack.c.0.s8 %v533
  %v535 = vlaneseq
  %v536 = vshrl.u32 %v535, 7
  %v537 = vsub.s32 %v534, %v536
  %v538 = vrot.slane %v529, %v537
  %v539 = vrot.slane %v538, 2
  %541 = vst [vmem:[#allocation3 + $0x3] sm:$0x1] %v539
  %s542 = scalar_lea.vmem [#allocation2], 2
  %v543 = vld [vmem:[%s542] ss:$8 sm:$0x3]
  %544 = vst [vmem:[#allocation3 + $0x4] sm:$0x1] %v543
  %v547 = vunpack.c.l.s4 857870592
  %v548 = vunpack.c.0.s8 %v547
  %v549 = vlaneseq
  %v550 = vshrl.u32 %v549, 7
  %v551 = vsub.s32 %v548, %v550
  %v552 = vrot.slane %v543, %v551
  %v553 = vrot.slane %v552, 2
  %555 = vst [vmem:[#allocation3 + $0x5] sm:$0x1] %v553
  %s556 = scalar_lea.vmem [#allocation2], 3
  %v557 = vld [vmem:[%s556] ss:$8 sm:$0x3]
  %558 = vst [vmem:[#allocation3 + $0x6] sm:$0x1] %v557
  %v561 = vunpack.c.l.s4 857870592
  %v562 = vunpack.c.0.s8 %v561
  %v563 = vlaneseq
  %v564 = vshrl.u32 %v563, 7
  %v565 = vsub.s32 %v562, %v564
  %v566 = vrot.slane %v557, %v565
  %v567 = vrot.slane %v566, 2
  %569 = vst [vmem:[#allocation3 + $0x7] sm:$0x1] %v567
  %s570 = scalar_lea.vmem [#allocation2], 4
  %v571 = vld [vmem:[%s570] ss:$8 sm:$0x3]
  %572 = vst [vmem:[#allocation3 + $0x8] sm:$0x1] %v571
  %v575 = vunpack.c.l.s4 857870592
  %v576 = vunpack.c.0.s8 %v575
  %v577 = vlaneseq
  %v578 = vshrl.u32 %v577, 7
  %v579 = vsub.s32 %v576, %v578
  %v580 = vrot.slane %v571, %v579
  %v581 = vrot.slane %v580, 2
  %583 = vst [vmem:[#allocation3 + $0x9] sm:$0x1] %v581
  %s584 = scalar_lea.vmem [#allocation2], 5
  %v585 = vld [vmem:[%s584] ss:$8 sm:$0x3]
  %586 = vst [vmem:[#allocation3 + $0xa] sm:$0x1] %v585
  %v589 = vunpack.c.l.s4 857870592
  %v590 = vunpack.c.0.s8 %v589
  %v591 = vlaneseq
  %v592 = vshrl.u32 %v591, 7
  %v593 = vsub.s32 %v590, %v592
  %v594 = vrot.slane %v585, %v593
  %v595 = vrot.slane %v594, 2
  %597 = vst [vmem:[#allocation3 + $0xb] sm:$0x1] %v595
  %s598 = scalar_lea.vmem [#allocation2], 6
  %v599 = vld [vmem:[%s598] ss:$8 sm:$0x3]
  %600 = vst [vmem:[#allocation3 + $0xc] sm:$0x1] %v599
  %v603 = vunpack.c.l.s4 857870592
  %v604 = vunpack.c.0.s8 %v603
  %v605 = vlaneseq
  %v606 = vshrl.u32 %v605, 7
  %v607 = vsub.s32 %v604, %v606
  %v608 = vrot.slane %v599, %v607
  %v609 = vrot.slane %v608, 2
  %611 = vst [vmem:[#allocation3 + $0xd] sm:$0x1] %v609
  %s612 = scalar_lea.vmem [#allocation2], 7
  %v613 = vld [vmem:[%s612] ss:$8 sm:$0x3]
  %614 = vst [vmem:[#allocation3 + $0xe] sm:$0x1] %v613
  %v617 = vunpack.c.l.s4 857870592
  %v618 = vunpack.c.0.s8 %v617
  %v619 = vlaneseq
  %v620 = vshrl.u32 %v619, 7
  %v621 = vsub.s32 %v618, %v620
  %v622 = vrot.slane %v613, %v621
  %v623 = vrot.slane %v622, 2
  %625 = vst [vmem:[#allocation3 + $0xf] sm:$0x1] %v623
  %s626 = scalar_lea.vmem [#allocation2], 16
  %v627 = vld [vmem:[%s626] ss:$8 sm:$0x3]
  %628 = vst [vmem:[#allocation3 + $0x10] sm:$0x1] %v627
  %v631 = vunpack.c.l.s4 857870592
  %v632 = vunpack.c.0.s8 %v631
  %v633 = vlaneseq
  %v634 = vshrl.u32 %v633, 7
  %v635 = vsub.s32 %v632, %v634
  %v636 = vrot.slane %v627, %v635
  %v637 = vrot.slane %v636, 2
  %639 = vst [vmem:[#allocation3 + $0x11] sm:$0x1] %v637
  %s640 = scalar_lea.vmem [#allocation2], 17
  %v641 = vld [vmem:[%s640] ss:$8 sm:$0x3]
  %642 = vst [vmem:[#allocation3 + $0x12] sm:$0x1] %v641
  %v645 = vunpack.c.l.s4 857870592
  %v646 = vunpack.c.0.s8 %v645
  %v647 = vlaneseq
  %v648 = vshrl.u32 %v647, 7
  %v649 = vsub.s32 %v646, %v648
  %v650 = vrot.slane %v641, %v649
  %v651 = vrot.slane %v650, 2
  %653 = vst [vmem:[#allocation3 + $0x13] sm:$0x1] %v651
  %s654 = scalar_lea.vmem [#allocation2], 18
  %v655 = vld [vmem:[%s654] ss:$8 sm:$0x3]
  %656 = vst [vmem:[#allocation3 + $0x14] sm:$0x1] %v655
  %v659 = vunpack.c.l.s4 857870592
  %v660 = vunpack.c.0.s8 %v659
  %v661 = vlaneseq
  %v662 = vshrl.u32 %v661, 7
  %v663 = vsub.s32 %v660, %v662
  %v664 = vrot.slane %v655, %v663
  %v665 = vrot.slane %v664, 2
  %667 = vst [vmem:[#allocation3 + $0x15] sm:$0x1] %v665
  %s668 = scalar_lea.vmem [#allocation2], 19
  %v669 = vld [vmem:[%s668] ss:$8 sm:$0x3]
  %670 = vst [vmem:[#allocation3 + $0x16] sm:$0x1] %v669
  %v673 = vunpack.c.l.s4 857870592
  %v674 = vunpack.c.0.s8 %v673
  %v675 = vlaneseq
  %v676 = vshrl.u32 %v675, 7
  %v677 = vsub.s32 %v674, %v676
  %v678 = vrot.slane %v669, %v677
  %v679 = vrot.slane %v678, 2
  %681 = vst [vmem:[#allocation3 + $0x17] sm:$0x1] %v679
  %s682 = scalar_lea.vmem [#allocation2], 20
  %v683 = vld [vmem:[%s682] ss:$8 sm:$0x3]
  %684 = vst [vmem:[#allocation3 + $0x18] sm:$0x1] %v683
  %v687 = vunpack.c.l.s4 857870592
  %v688 = vunpack.c.0.s8 %v687
  %v689 = vlaneseq
  %v690 = vshrl.u32 %v689, 7
  %v691 = vsub.s32 %v688, %v690
  %v692 = vrot.slane %v683, %v691
  %v693 = vrot.slane %v692, 2
  %695 = vst [vmem:[#allocation3 + $0x19] sm:$0x1] %v693
  %s696 = scalar_lea.vmem [#allocation2], 21
  %v697 = vld [vmem:[%s696] ss:$8 sm:$0x3]
  %698 = vst [vmem:[#allocation3 + $0x1a] sm:$0x1] %v697
  %v701 = vunpack.c.l.s4 857870592
  %v702 = vunpack.c.0.s8 %v701
  %v703 = vlaneseq
  %v704 = vshrl.u32 %v703, 7
  %v705 = vsub.s32 %v702, %v704
  %v706 = vrot.slane %v697, %v705
  %v707 = vrot.slane %v706, 2
  %709 = vst [vmem:[#allocation3 + $0x1b] sm:$0x1] %v707
  %s710 = scalar_lea.vmem [#allocation2], 22
  %v711 = vld [vmem:[%s710] ss:$8 sm:$0x3]
  %712 = vst [vmem:[#allocation3 + $0x1c] sm:$0x1] %v711
  %v715 = vunpack.c.l.s4 857870592
  %v716 = vunpack.c.0.s8 %v715
  %v717 = vlaneseq
  %v718 = vshrl.u32 %v717, 7
  %v719 = vsub.s32 %v716, %v718
  %v720 = vrot.slane %v711, %v719
  %v721 = vrot.slane %v720, 2
  %723 = vst [vmem:[#allocation3 + $0x1d] sm:$0x1] %v721
  %s724 = scalar_lea.vmem [#allocation2], 23
  %v725 = vld [vmem:[%s724] ss:$8 sm:$0x3]
  %726 = vst [vmem:[#allocation3 + $0x1e] sm:$0x1] %v725
  %v729 = vunpack.c.l.s4 857870592
  %v730 = vunpack.c.0.s8 %v729
  %v731 = vlaneseq
  %v732 = vshrl.u32 %v731, 7
  %v733 = vsub.s32 %v730, %v732
  %v734 = vrot.slane %v725, %v733
  %v735 = vrot.slane %v734, 2
  %737 = vst [vmem:[#allocation3 + $0x1f] sm:$0x1] %v735
  %v738 = vld [vmem:[#allocation3] sm:$0xff]
  %v739 = vld [vmem:[#allocation3 + $0x8] sm:$0xff]
  %v740 = vld [vmem:[#allocation3 + $0x10] sm:$0xff]
  %v741 = vld [vmem:[#allocation3 + $0x18] sm:$0xff]
  %v742 = vld [vmem:[%s8] sm:$0xff]
  %v743 = vld [vmem:[%s8 + $0x8] sm:$0xff]
  %v744 = vld [vmem:[%s8 + $0x10] sm:$0xff]
  %v745 = vld [vmem:[%s8 + $0x18] sm:$0xff]
  %v746 = vld [vmem:[%s8 + $0x20] sm:$0xff]
  %v747 = vld [vmem:[%s8 + $0x28] sm:$0xff]
  %v748 = vld [vmem:[%s8 + $0x30] sm:$0xff]
  %v749 = vld [vmem:[%s8 + $0x38] sm:$0xff]
  %v750 = vld [vmem:[%s8 + $0x40] sm:$0xff]
  %v751 = vld [vmem:[%s8 + $0x48] sm:$0xff]
  %v752 = vld [vmem:[%s8 + $0x50] sm:$0xff]
  %v753 = vld [vmem:[%s8 + $0x58] sm:$0xff]
  %v754 = vld [vmem:[%s8 + $0x60] sm:$0xff]
  %v755 = vld [vmem:[%s8 + $0x68] sm:$0xff]
  %v756 = vld [vmem:[%s8 + $0x70] sm:$0xff]
  %v757 = vld [vmem:[%s8 + $0x78] sm:$0xff]
  %v758 = vld [vmem:[%s8 + $0x80] sm:$0xff]
  %v759 = vld [vmem:[%s8 + $0x88] sm:$0xff]
  %v760 = vld [vmem:[%s8 + $0x90] sm:$0xff]
  %v761 = vld [vmem:[%s8 + $0x98] sm:$0xff]
  %v762 = vld [vmem:[%s8 + $0xa0] sm:$0xff]
  %v763 = vld [vmem:[%s8 + $0xa8] sm:$0xff]
  %v764 = vld [vmem:[%s8 + $0xb0] sm:$0xff]
  %v765 = vld [vmem:[%s8 + $0xb8] sm:$0xff]
  %v766 = vld [vmem:[%s8 + $0xc0] sm:$0xff]
  %v767 = vld [vmem:[%s8 + $0xc8] sm:$0xff]
  %v768 = vld [vmem:[%s8 + $0xd0] sm:$0xff]
  %v769 = vld [vmem:[%s8 + $0xd8] sm:$0xff]
  %v770 = vld [vmem:[%s8 + $0xe0] sm:$0xff]
  %v771 = vld [vmem:[%s8 + $0xe8] sm:$0xff]
  %v772 = vld [vmem:[%s8 + $0xf0] sm:$0xff]
  %v773 = vld [vmem:[%s8 + $0xf8] sm:$0xff]
  %v774 = vld [vmem:[%s8 + $0x100] sm:$0xff]
  %v775 = vld [vmem:[%s8 + $0x108] sm:$0xff]
  %v776 = vld [vmem:[%s8 + $0x110] sm:$0xff]
  %v777 = vld [vmem:[%s8 + $0x118] sm:$0xff]
  %v778 = vld [vmem:[%s8 + $0x120] sm:$0xff]
  %v779 = vld [vmem:[%s8 + $0x128] sm:$0xff]
  %v780 = vld [vmem:[%s8 + $0x130] sm:$0xff]
  %v781 = vld [vmem:[%s8 + $0x138] sm:$0xff]
  %v782 = vld [vmem:[%s8 + $0x140] sm:$0xff]
  %v783 = vld [vmem:[%s8 + $0x148] sm:$0xff]
  %v784 = vld [vmem:[%s8 + $0x150] sm:$0xff]
  %v785 = vld [vmem:[%s8 + $0x158] sm:$0xff]
  %v786 = vld [vmem:[%s8 + $0x160] sm:$0xff]
  %v787 = vld [vmem:[%s8 + $0x168] sm:$0xff]
  %v788 = vld [vmem:[%s8 + $0x170] sm:$0xff]
  %v789 = vld [vmem:[%s8 + $0x178] sm:$0xff]
  %v790 = vld [vmem:[%s8 + $0x180] sm:$0xff]
  %v791 = vld [vmem:[%s8 + $0x188] sm:$0xff]
  %v792 = vld [vmem:[%s8 + $0x190] sm:$0xff]
  %v793 = vld [vmem:[%s8 + $0x198] sm:$0xff]
  %v794 = vld [vmem:[%s8 + $0x1a0] sm:$0xff]
  %v795 = vld [vmem:[%s8 + $0x1a8] sm:$0xff]
  %v796 = vld [vmem:[%s8 + $0x1b0] sm:$0xff]
  %v797 = vld [vmem:[%s8 + $0x1b8] sm:$0xff]
  %v798 = vld [vmem:[%s8 + $0x1c0] sm:$0xff]
  %v799 = vld [vmem:[%s8 + $0x1c8] sm:$0xff]
  %v800 = vld [vmem:[%s8 + $0x1d0] sm:$0xff]
  %v801 = vld [vmem:[%s8 + $0x1d8] sm:$0xff]
  %v802 = vld [vmem:[%s8 + $0x1e0] sm:$0xff]
  %v803 = vld [vmem:[%s8 + $0x1e8] sm:$0xff]
  %v804 = vld [vmem:[%s8 + $0x1f0] sm:$0xff]
  %v805 = vld [vmem:[%s8 + $0x1f8] sm:$0xff]
  %v806 = vld [vmem:[%s8 + $0x200] sm:$0xff]
  %v807 = vld [vmem:[%s8 + $0x208] sm:$0xff]
  %v808 = vld [vmem:[%s8 + $0x210] sm:$0xff]
  %v809 = vld [vmem:[%s8 + $0x218] sm:$0xff]
  %v810 = vld [vmem:[%s8 + $0x220] sm:$0xff]
  %v811 = vld [vmem:[%s8 + $0x228] sm:$0xff]
  %v812 = vld [vmem:[%s8 + $0x230] sm:$0xff]
  %v813 = vld [vmem:[%s8 + $0x238] sm:$0xff]
  %v814 = vld [vmem:[%s8 + $0x240] sm:$0xff]
  %v815 = vld [vmem:[%s8 + $0x248] sm:$0xff]
  %v816 = vld [vmem:[%s8 + $0x250] sm:$0xff]
  %v817 = vld [vmem:[%s8 + $0x258] sm:$0xff]
  %v818 = vld [vmem:[%s8 + $0x260] sm:$0xff]
  %v819 = vld [vmem:[%s8 + $0x268] sm:$0xff]
  %v820 = vld [vmem:[%s8 + $0x270] sm:$0xff]
  %v821 = vld [vmem:[%s8 + $0x278] sm:$0xff]
  %v822 = vld [vmem:[%s8 + $0x280] sm:$0xff]
  %v823 = vld [vmem:[%s8 + $0x288] sm:$0xff]
  %v824 = vld [vmem:[%s8 + $0x290] sm:$0xff]
  %v825 = vld [vmem:[%s8 + $0x298] sm:$0xff]
  %v826 = vld [vmem:[%s8 + $0x2a0] sm:$0xff]
  %v827 = vld [vmem:[%s8 + $0x2a8] sm:$0xff]
  %v828 = vld [vmem:[%s8 + $0x2b0] sm:$0xff]
  %v829 = vld [vmem:[%s8 + $0x2b8] sm:$0xff]
  %v830 = vld [vmem:[%s8 + $0x2c0] sm:$0xff]
  %v831 = vld [vmem:[%s8 + $0x2c8] sm:$0xff]
  %v832 = vld [vmem:[%s8 + $0x2d0] sm:$0xff]
  %v833 = vld [vmem:[%s8 + $0x2d8] sm:$0xff]
  %v834 = vld [vmem:[%s8 + $0x2e0] sm:$0xff]
  %v835 = vld [vmem:[%s8 + $0x2e8] sm:$0xff]
  %v836 = vld [vmem:[%s8 + $0x2f0] sm:$0xff]
  %v837 = vld [vmem:[%s8 + $0x2f8] sm:$0xff]
  %v838 = vld [vmem:[%s8 + $0x300] sm:$0xff]
  %v839 = vld [vmem:[%s8 + $0x308] sm:$0xff]
  %v840 = vld [vmem:[%s8 + $0x310] sm:$0xff]
  %v841 = vld [vmem:[%s8 + $0x318] sm:$0xff]
  %v842 = vld [vmem:[%s8 + $0x320] sm:$0xff]
  %v843 = vld [vmem:[%s8 + $0x328] sm:$0xff]
  %v844 = vld [vmem:[%s8 + $0x330] sm:$0xff]
  %v845 = vld [vmem:[%s8 + $0x338] sm:$0xff]
  %v846 = vld [vmem:[%s8 + $0x340] sm:$0xff]
  %v847 = vld [vmem:[%s8 + $0x348] sm:$0xff]
  %v848 = vld [vmem:[%s8 + $0x350] sm:$0xff]
  %v849 = vld [vmem:[%s8 + $0x358] sm:$0xff]
  %v850 = vld [vmem:[%s8 + $0x360] sm:$0xff]
  %v851 = vld [vmem:[%s8 + $0x368] sm:$0xff]
  %v852 = vld [vmem:[%s8 + $0x370] sm:$0xff]
  %v853 = vld [vmem:[%s8 + $0x378] sm:$0xff]
  %v854 = vld [vmem:[%s8 + $0x380] sm:$0xff]
  %v855 = vld [vmem:[%s8 + $0x388] sm:$0xff]
  %v856 = vld [vmem:[%s8 + $0x390] sm:$0xff]
  %v857 = vld [vmem:[%s8 + $0x398] sm:$0xff]
  %v858 = vld [vmem:[%s8 + $0x3a0] sm:$0xff]
  %v859 = vld [vmem:[%s8 + $0x3a8] sm:$0xff]
  %v860 = vld [vmem:[%s8 + $0x3b0] sm:$0xff]
  %v861 = vld [vmem:[%s8 + $0x3b8] sm:$0xff]
  %v862 = vld [vmem:[%s8 + $0x3c0] sm:$0xff]
  %v863 = vld [vmem:[%s8 + $0x3c8] sm:$0xff]
  %v864 = vld [vmem:[%s8 + $0x3d0] sm:$0xff]
  %v865 = vld [vmem:[%s8 + $0x3d8] sm:$0xff]
  %v866 = vld [vmem:[%s8 + $0x3e0] sm:$0xff]
  %v867 = vld [vmem:[%s8 + $0x3e8] sm:$0xff]
  %v868 = vld [vmem:[%s8 + $0x3f0] sm:$0xff]
  %v869 = vld [vmem:[%s8 + $0x3f8] sm:$0xff]
  %v870 = vld [vmem:[%s8 + $0x400] sm:$0xff]
  %v871 = vld [vmem:[%s8 + $0x408] sm:$0xff]
  %v872 = vld [vmem:[%s8 + $0x410] sm:$0xff]
  %v873 = vld [vmem:[%s8 + $0x418] sm:$0xff]
  %v874 = vld [vmem:[%s8 + $0x420] sm:$0xff]
  %v875 = vld [vmem:[%s8 + $0x428] sm:$0xff]
  %v876 = vld [vmem:[%s8 + $0x430] sm:$0xff]
  %v877 = vld [vmem:[%s8 + $0x438] sm:$0xff]
  %v878 = vld [vmem:[%s8 + $0x440] sm:$0xff]
  %v879 = vld [vmem:[%s8 + $0x448] sm:$0xff]
  %v880 = vld [vmem:[%s8 + $0x450] sm:$0xff]
  %v881 = vld [vmem:[%s8 + $0x458] sm:$0xff]
  %v882 = vld [vmem:[%s8 + $0x460] sm:$0xff]
  %v883 = vld [vmem:[%s8 + $0x468] sm:$0xff]
  %v884 = vld [vmem:[%s8 + $0x470] sm:$0xff]
  %v885 = vld [vmem:[%s8 + $0x478] sm:$0xff]
  %v886 = vld [vmem:[%s8 + $0x480] sm:$0xff]
  %v887 = vld [vmem:[%s8 + $0x488] sm:$0xff]
  %v888 = vld [vmem:[%s8 + $0x490] sm:$0xff]
  %v889 = vld [vmem:[%s8 + $0x498] sm:$0xff]
  %v890 = vld [vmem:[%s8 + $0x4a0] sm:$0xff]
  %v891 = vld [vmem:[%s8 + $0x4a8] sm:$0xff]
  %v892 = vld [vmem:[%s8 + $0x4b0] sm:$0xff]
  %v893 = vld [vmem:[%s8 + $0x4b8] sm:$0xff]
  %v894 = vld [vmem:[%s8 + $0x4c0] sm:$0xff]
  %v895 = vld [vmem:[%s8 + $0x4c8] sm:$0xff]
  %v896 = vld [vmem:[%s8 + $0x4d0] sm:$0xff]
  %v897 = vld [vmem:[%s8 + $0x4d8] sm:$0xff]
  %v898 = vld [vmem:[%s8 + $0x4e0] sm:$0xff]
  %v899 = vld [vmem:[%s8 + $0x4e8] sm:$0xff]
  %v900 = vld [vmem:[%s8 + $0x4f0] sm:$0xff]
  %v901 = vld [vmem:[%s8 + $0x4f8] sm:$0xff]
  %v902 = vld [vmem:[%s8 + $0x500] sm:$0xff]
  %v903 = vld [vmem:[%s8 + $0x508] sm:$0xff]
  %v904 = vld [vmem:[%s8 + $0x510] sm:$0xff]
  %v905 = vld [vmem:[%s8 + $0x518] sm:$0xff]
  %v906 = vld [vmem:[%s8 + $0x520] sm:$0xff]
  %v907 = vld [vmem:[%s8 + $0x528] sm:$0xff]
  %v908 = vld [vmem:[%s8 + $0x530] sm:$0xff]
  %v909 = vld [vmem:[%s8 + $0x538] sm:$0xff]
  %v910 = vld [vmem:[%s8 + $0x540] sm:$0xff]
  %v911 = vld [vmem:[%s8 + $0x548] sm:$0xff]
  %v912 = vld [vmem:[%s8 + $0x550] sm:$0xff]
  %v913 = vld [vmem:[%s8 + $0x558] sm:$0xff]
  %v914 = vld [vmem:[%s8 + $0x560] sm:$0xff]
  %v915 = vld [vmem:[%s8 + $0x568] sm:$0xff]
  %v916 = vld [vmem:[%s8 + $0x570] sm:$0xff]
  %v917 = vld [vmem:[%s8 + $0x578] sm:$0xff]
  %v918 = vld [vmem:[%s8 + $0x580] sm:$0xff]
  %v919 = vld [vmem:[%s8 + $0x588] sm:$0xff]
  %v920 = vld [vmem:[%s8 + $0x590] sm:$0xff]
  %v921 = vld [vmem:[%s8 + $0x598] sm:$0xff]
  %v922 = vld [vmem:[%s8 + $0x5a0] sm:$0xff]
  %v923 = vld [vmem:[%s8 + $0x5a8] sm:$0xff]
  %v924 = vld [vmem:[%s8 + $0x5b0] sm:$0xff]
  %v925 = vld [vmem:[%s8 + $0x5b8] sm:$0xff]
  %v926 = vld [vmem:[%s8 + $0x5c0] sm:$0xff]
  %v927 = vld [vmem:[%s8 + $0x5c8] sm:$0xff]
  %v928 = vld [vmem:[%s8 + $0x5d0] sm:$0xff]
  %v929 = vld [vmem:[%s8 + $0x5d8] sm:$0xff]
  %v930 = vld [vmem:[%s8 + $0x5e0] sm:$0xff]
  %v931 = vld [vmem:[%s8 + $0x5e8] sm:$0xff]
  %v932 = vld [vmem:[%s8 + $0x5f0] sm:$0xff]
  %v933 = vld [vmem:[%s8 + $0x5f8] sm:$0xff]
  %v934 = vld [vmem:[%s8 + $0x600] sm:$0xff]
  %v935 = vld [vmem:[%s8 + $0x608] sm:$0xff]
  %v936 = vld [vmem:[%s8 + $0x610] sm:$0xff]
  %v937 = vld [vmem:[%s8 + $0x618] sm:$0xff]
  %v938 = vld [vmem:[%s8 + $0x620] sm:$0xff]
  %v939 = vld [vmem:[%s8 + $0x628] sm:$0xff]
  %v940 = vld [vmem:[%s8 + $0x630] sm:$0xff]
  %v941 = vld [vmem:[%s8 + $0x638] sm:$0xff]
  %v942 = vld [vmem:[%s8 + $0x640] sm:$0xff]
  %v943 = vld [vmem:[%s8 + $0x648] sm:$0xff]
  %v944 = vld [vmem:[%s8 + $0x650] sm:$0xff]
  %v945 = vld [vmem:[%s8 + $0x658] sm:$0xff]
  %v946 = vld [vmem:[%s8 + $0x660] sm:$0xff]
  %v947 = vld [vmem:[%s8 + $0x668] sm:$0xff]
  %v948 = vld [vmem:[%s8 + $0x670] sm:$0xff]
  %v949 = vld [vmem:[%s8 + $0x678] sm:$0xff]
  %v950 = vld [vmem:[%s8 + $0x680] sm:$0xff]
  %v951 = vld [vmem:[%s8 + $0x688] sm:$0xff]
  %v952 = vld [vmem:[%s8 + $0x690] sm:$0xff]
  %v953 = vld [vmem:[%s8 + $0x698] sm:$0xff]
  %v954 = vld [vmem:[%s8 + $0x6a0] sm:$0xff]
  %v955 = vld [vmem:[%s8 + $0x6a8] sm:$0xff]
  %v956 = vld [vmem:[%s8 + $0x6b0] sm:$0xff]
  %v957 = vld [vmem:[%s8 + $0x6b8] sm:$0xff]
  %v958 = vld [vmem:[%s8 + $0x6c0] sm:$0xff]
  %v959 = vld [vmem:[%s8 + $0x6c8] sm:$0xff]
  %v960 = vld [vmem:[%s8 + $0x6d0] sm:$0xff]
  %v961 = vld [vmem:[%s8 + $0x6d8] sm:$0xff]
  %v962 = vld [vmem:[%s8 + $0x6e0] sm:$0xff]
  %v963 = vld [vmem:[%s8 + $0x6e8] sm:$0xff]
  %v964 = vld [vmem:[%s8 + $0x6f0] sm:$0xff]
  %v965 = vld [vmem:[%s8 + $0x6f8] sm:$0xff]
  %v966 = vld [vmem:[%s8 + $0x700] sm:$0xff]
  %v967 = vld [vmem:[%s8 + $0x708] sm:$0xff]
  %v968 = vld [vmem:[%s8 + $0x710] sm:$0xff]
  %v969 = vld [vmem:[%s8 + $0x718] sm:$0xff]
  %v970 = vld [vmem:[%s8 + $0x720] sm:$0xff]
  %v971 = vld [vmem:[%s8 + $0x728] sm:$0xff]
  %v972 = vld [vmem:[%s8 + $0x730] sm:$0xff]
  %v973 = vld [vmem:[%s8 + $0x738] sm:$0xff]
  %v974 = vld [vmem:[%s8 + $0x740] sm:$0xff]
  %v975 = vld [vmem:[%s8 + $0x748] sm:$0xff]
  %v976 = vld [vmem:[%s8 + $0x750] sm:$0xff]
  %v977 = vld [vmem:[%s8 + $0x758] sm:$0xff]
  %v978 = vld [vmem:[%s8 + $0x760] sm:$0xff]
  %v979 = vld [vmem:[%s8 + $0x768] sm:$0xff]
  %v980 = vld [vmem:[%s8 + $0x770] sm:$0xff]
  %v981 = vld [vmem:[%s8 + $0x778] sm:$0xff]
  %v982 = vld [vmem:[%s8 + $0x780] sm:$0xff]
  %v983 = vld [vmem:[%s8 + $0x788] sm:$0xff]
  %v984 = vld [vmem:[%s8 + $0x790] sm:$0xff]
  %v985 = vld [vmem:[%s8 + $0x798] sm:$0xff]
  %v986 = vld [vmem:[%s8 + $0x7a0] sm:$0xff]
  %v987 = vld [vmem:[%s8 + $0x7a8] sm:$0xff]
  %v988 = vld [vmem:[%s8 + $0x7b0] sm:$0xff]
  %v989 = vld [vmem:[%s8 + $0x7b8] sm:$0xff]
  %v990 = vld [vmem:[%s8 + $0x7c0] sm:$0xff]
  %v991 = vld [vmem:[%s8 + $0x7c8] sm:$0xff]
  %v992 = vld [vmem:[%s8 + $0x7d0] sm:$0xff]
  %v993 = vld [vmem:[%s8 + $0x7d8] sm:$0xff]
  %v994 = vld [vmem:[%s8 + $0x7e0] sm:$0xff]
  %v995 = vld [vmem:[%s8 + $0x7e8] sm:$0xff]
  %v996 = vld [vmem:[%s8 + $0x7f0] sm:$0xff]
  %v997 = vld [vmem:[%s8 + $0x7f8] sm:$0xff]
  %v998 = vld [vmem:[%s9] sm:$0x1]
  %v1000 = vlaneseq
  %v1001 = vshrl.u32 %v1000, 7
  %v1002 = vsub.s32 0, %v1001
  %v1003 = vrot.slane %v998, %v1002
  %v1009 = vcombine.high %v738, %v738
  %v1011 = vunpack.c.l.s4 1983009808
  %v1012 = vunpack.c.0.s8 %v1011
  %v1013 = vlaneseq
  %v1014 = vshrl.u32 %v1013, 7
  %v1015 = vsub.s32 %v1012, %v1014
  %v1016 = vrot.slane %v738, %v1015
  %v1018 = vunpack.c.l.s4 1983009808
  %v1019 = vunpack.c.0.s8 %v1018
  %v1020 = vlaneseq
  %v1021 = vshrl.u32 %v1020, 7
  %v1022 = vsub.s32 %v1019, %v1021
  %v1023 = vrot.slane %v1009, %v1022
  %v1024 = vcombine.high %v1016, %v1016
  %v1025 = vcombine.high %v1023, %v1023
  %v1026 = vcombine.high %v739, %v739
  %v1028 = vunpack.c.l.s4 1983009808
  %v1029 = vunpack.c.0.s8 %v1028
  %v1030 = vlaneseq
  %v1031 = vshrl.u32 %v1030, 7
  %v1032 = vsub.s32 %v1029, %v1031
  %v1033 = vrot.slane %v739, %v1032
  %v1035 = vunpack.c.l.s4 1983009808
  %v1036 = vunpack.c.0.s8 %v1035
  %v1037 = vlaneseq
  %v1038 = vshrl.u32 %v1037, 7
  %v1039 = vsub.s32 %v1036, %v1038
  %v1040 = vrot.slane %v1026, %v1039
  %v1041 = vcombine.high %v1033, %v1033
  %v1042 = vcombine.high %v1040, %v1040
  %v1043 = vcombine.high %v740, %v740
  %v1045 = vunpack.c.l.s4 1983009808
  %v1046 = vunpack.c.0.s8 %v1045
  %v1047 = vlaneseq
  %v1048 = vshrl.u32 %v1047, 7
  %v1049 = vsub.s32 %v1046, %v1048
  %v1050 = vrot.slane %v740, %v1049
  %v1052 = vunpack.c.l.s4 1983009808
  %v1053 = vunpack.c.0.s8 %v1052
  %v1054 = vlaneseq
  %v1055 = vshrl.u32 %v1054, 7
  %v1056 = vsub.s32 %v1053, %v1055
  %v1057 = vrot.slane %v1043, %v1056
  %v1058 = vcombine.high %v1050, %v1050
  %v1059 = vcombine.high %v1057, %v1057
  %v1060 = vcombine.high %v741, %v741
  %v1062 = vunpack.c.l.s4 1983009808
  %v1063 = vunpack.c.0.s8 %v1062
  %v1064 = vlaneseq
  %v1065 = vshrl.u32 %v1064, 7
  %v1066 = vsub.s32 %v1063, %v1065
  %v1067 = vrot.slane %v741, %v1066
  %v1069 = vunpack.c.l.s4 1983009808
  %v1070 = vunpack.c.0.s8 %v1069
  %v1071 = vlaneseq
  %v1072 = vshrl.u32 %v1071, 7
  %v1073 = vsub.s32 %v1070, %v1072
  %v1074 = vrot.slane %v1060, %v1073
  %v1075 = vcombine.high %v1067, %v1067
  %v1076 = vcombine.high %v1074, %v1074
  %1093 = vmatprep.subr.mxu0 0.0
  %1094 = vmatpush1.msra.mxu0 %v742
  %1095 = vmatprep.subr.mxu0 0.0
  %1096 = vmatpush1.msra.mxu0 %v743
  %1097 = vmatprep.subr.mxu0 0.0
  %1098 = vmatpush1.msra.mxu0 %v744
  %1099 = vmatprep.subr.mxu0 0.0
  %1100 = vmatpush1.msra.mxu0 %v745
  %1101 = vmatprep.subr.mxu0 0.0
  %1102 = vmatpush1.msra.mxu0 %v746
  %1103 = vmatprep.subr.mxu0 0.0
  %1104 = vmatpush1.msra.mxu0 %v747
  %1105 = vmatprep.subr.mxu0 0.0
  %1106 = vmatpush1.msra.mxu0 %v748
  %1107 = vmatprep.subr.mxu0 0.0
  %1108 = vmatpush1.msra.mxu0 %v749
  %1109 = vmatprep.subr.mxu0 0.0
  %1110 = vmatpush1.msra.mxu0 %v750
  %1111 = vmatprep.subr.mxu0 0.0
  %1112 = vmatpush1.msra.mxu0 %v751
  %1113 = vmatprep.subr.mxu0 0.0
  %1114 = vmatpush1.msra.mxu0 %v752
  %1115 = vmatprep.subr.mxu0 0.0
  %1116 = vmatpush1.msra.mxu0 %v753
  %1117 = vmatprep.subr.mxu0 0.0
  %1118 = vmatpush1.msra.mxu0 %v754
  %1119 = vmatprep.subr.mxu0 0.0
  %1120 = vmatpush1.msra.mxu0 %v755
  %1121 = vmatprep.subr.mxu0 0.0
  %1122 = vmatpush1.msra.mxu0 %v756
  %1123 = vmatprep.subr.mxu0 0.0
  %1124 = vmatpush1.msra.mxu0 %v757
  %1125 = vmatprep.subr.mxu0 0.0
  %1126 = vmatpush1.msra.mxu0 %v758
  %1127 = vmatprep.subr.mxu0 0.0
  %1128 = vmatpush1.msra.mxu0 %v759
  %1129 = vmatprep.subr.mxu0 0.0
  %1130 = vmatpush1.msra.mxu0 %v760
  %1131 = vmatprep.subr.mxu0 0.0
  %1132 = vmatpush1.msra.mxu0 %v761
  %1133 = vmatprep.subr.mxu0 0.0
  %1134 = vmatpush1.msra.mxu0 %v762
  %1135 = vmatprep.subr.mxu0 0.0
  %1136 = vmatpush1.msra.mxu0 %v763
  %1137 = vmatprep.subr.mxu0 0.0
  %1138 = vmatpush1.msra.mxu0 %v764
  %1139 = vmatprep.subr.mxu0 0.0
  %1140 = vmatpush1.msra.mxu0 %v765
  %1141 = vmatprep.subr.mxu0 0.0
  %1142 = vmatpush1.msra.mxu0 %v766
  %1143 = vmatprep.subr.mxu0 0.0
  %1144 = vmatpush1.msra.mxu0 %v767
  %1145 = vmatprep.subr.mxu0 0.0
  %1146 = vmatpush1.msra.mxu0 %v768
  %1147 = vmatprep.subr.mxu0 0.0
  %1148 = vmatpush1.msra.mxu0 %v769
  %1149 = vmatprep.subr.mxu0 0.0
  %1150 = vmatpush1.msra.mxu0 %v770
  %1151 = vmatprep.subr.mxu0 0.0
  %1152 = vmatpush1.msra.mxu0 %v771
  %1153 = vmatprep.subr.mxu0 0.0
  %1154 = vmatpush1.msra.mxu0 %v772
  %1155 = vmatprep.subr.mxu0 0.0
  %1156 = vmatpush1.msra.mxu0 %v773
  %1157 = vmatprep.mubr.f32.mxu0 %v1024
  %1158 = vmatmul.mubr.f32.gmra.mrb[0].mxu0 %v1016
  %v1159 = vpop.f32.mrb[0].mxu0
  %v1160 = vadd.f32 %v1003, %v1159
  %v1161 = vpop.f32.mrb[0].mxu0
  %1162 = vdwg.mxu0
  %1163 = vmatprep.subr.mxu0 0.0
  %1164 = vmatpush1.msra.mxu0 %v774
  %1165 = vmatprep.subr.mxu0 0.0
  %1166 = vmatpush1.msra.mxu0 %v775
  %1167 = vmatprep.subr.mxu0 0.0
  %1168 = vmatpush1.msra.mxu0 %v776
  %1169 = vmatprep.subr.mxu0 0.0
  %1170 = vmatpush1.msra.mxu0 %v777
  %1171 = vmatprep.subr.mxu0 0.0
  %1172 = vmatpush1.msra.mxu0 %v778
  %1173 = vmatprep.subr.mxu0 0.0
  %1174 = vmatpush1.msra.mxu0 %v779
  %1175 = vmatprep.subr.mxu0 0.0
  %1176 = vmatpush1.msra.mxu0 %v780
  %1177 = vmatprep.subr.mxu0 0.0
  %1178 = vmatpush1.msra.mxu0 %v781
  %1179 = vmatprep.subr.mxu0 0.0
  %1180 = vmatpush1.msra.mxu0 %v782
  %1181 = vmatprep.subr.mxu0 0.0
  %1182 = vmatpush1.msra.mxu0 %v783
  %1183 = vmatprep.subr.mxu0 0.0
  %1184 = vmatpush1.msra.mxu0 %v784
  %1185 = vmatprep.subr.mxu0 0.0
  %1186 = vmatpush1.msra.mxu0 %v785
  %1187 = vmatprep.subr.mxu0 0.0
  %1188 = vmatpush1.msra.mxu0 %v786
  %1189 = vmatprep.subr.mxu0 0.0
  %1190 = vmatpush1.msra.mxu0 %v787
  %1191 = vmatprep.subr.mxu0 0.0
  %1192 = vmatpush1.msra.mxu0 %v788
  %1193 = vmatprep.subr.mxu0 0.0
  %1194 = vmatpush1.msra.mxu0 %v789
  %1195 = vmatprep.subr.mxu0 0.0
  %1196 = vmatpush1.msra.mxu0 %v790
  %1197 = vmatprep.subr.mxu0 0.0
  %1198 = vmatpush1.msra.mxu0 %v791
  %1199 = vmatprep.subr.mxu0 0.0
  %1200 = vmatpush1.msra.mxu0 %v792
  %1201 = vmatprep.subr.mxu0 0.0
  %1202 = vmatpush1.msra.mxu0 %v793
  %1203 = vmatprep.subr.mxu0 0.0
  %1204 = vmatpush1.msra.mxu0 %v794
  %1205 = vmatprep.subr.mxu0 0.0
  %1206 = vmatpush1.msra.mxu0 %v795
  %1207 = vmatprep.subr.mxu0 0.0
  %1208 = vmatpush1.msra.mxu0 %v796
  %1209 = vmatprep.subr.mxu0 0.0
  %1210 = vmatpush1.msra.mxu0 %v797
  %1211 = vmatprep.subr.mxu0 0.0
  %1212 = vmatpush1.msra.mxu0 %v798
  %1213 = vmatprep.subr.mxu0 0.0
  %1214 = vmatpush1.msra.mxu0 %v799
  %1215 = vmatprep.subr.mxu0 0.0
  %1216 = vmatpush1.msra.mxu0 %v800
  %1217 = vmatprep.subr.mxu0 0.0
  %1218 = vmatpush1.msra.mxu0 %v801
  %1219 = vmatprep.subr.mxu0 0.0
  %1220 = vmatpush1.msra.mxu0 %v802
  %1221 = vmatprep.subr.mxu0 0.0
  %1222 = vmatpush1.msra.mxu0 %v803
  %1223 = vmatprep.subr.mxu0 0.0
  %1224 = vmatpush1.msra.mxu0 %v804
  %1225 = vmatprep.subr.mxu0 0.0
  %1226 = vmatpush1.msra.mxu0 %v805
  %1227 = vmatprep.mubr.f32.mxu0 %v1025
  %1228 = vmatmul.mubr.f32.gmra.mrb[0].mxu0 %v1023
  %v1229 = vpop.f32.mrb[0].mxu0
  %v1230 = vadd.f32 %v1160, %v1229
  %v1231 = vpop.f32.mrb[0].mxu0
  %1232 = vdwg.mxu0
  %1233 = vmatprep.subr.mxu0 0.0
  %1234 = vmatpush1.msra.mxu0 %v806
  %1235 = vmatprep.subr.mxu0 0.0
  %1236 = vmatpush1.msra.mxu0 %v807
  %1237 = vmatprep.subr.mxu0 0.0
  %1238 = vmatpush1.msra.mxu0 %v808
  %1239 = vmatprep.subr.mxu0 0.0
  %1240 = vmatpush1.msra.mxu0 %v809
  %1241 = vmatprep.subr.mxu0 0.0
  %1242 = vmatpush1.msra.mxu0 %v810
  %1243 = vmatprep.subr.mxu0 0.0
  %1244 = vmatpush1.msra.mxu0 %v811
  %1245 = vmatprep.subr.mxu0 0.0
  %1246 = vmatpush1.msra.mxu0 %v812
  %1247 = vmatprep.subr.mxu0 0.0
  %1248 = vmatpush1.msra.mxu0 %v813
  %1249 = vmatprep.subr.mxu0 0.0
  %1250 = vmatpush1.msra.mxu0 %v814
  %1251 = vmatprep.subr.mxu0 0.0
  %1252 = vmatpush1.msra.mxu0 %v815
  %1253 = vmatprep.subr.mxu0 0.0
  %1254 = vmatpush1.msra.mxu0 %v816
  %1255 = vmatprep.subr.mxu0 0.0
  %1256 = vmatpush1.msra.mxu0 %v817
  %1257 = vmatprep.subr.mxu0 0.0
  %1258 = vmatpush1.msra.mxu0 %v818
  %1259 = vmatprep.subr.mxu0 0.0
  %1260 = vmatpush1.msra.mxu0 %v819
  %1261 = vmatprep.subr.mxu0 0.0
  %1262 = vmatpush1.msra.mxu0 %v820
  %1263 = vmatprep.subr.mxu0 0.0
  %1264 = vmatpush1.msra.mxu0 %v821
  %1265 = vmatprep.subr.mxu0 0.0
  %1266 = vmatpush1.msra.mxu0 %v822
  %1267 = vmatprep.subr.mxu0 0.0
  %1268 = vmatpush1.msra.mxu0 %v823
  %1269 = vmatprep.subr.mxu0 0.0
  %1270 = vmatpush1.msra.mxu0 %v824
  %1271 = vmatprep.subr.mxu0 0.0
  %1272 = vmatpush1.msra.mxu0 %v825
  %1273 = vmatprep.subr.mxu0 0.0
  %1274 = vmatpush1.msra.mxu0 %v826
  %1275 = vmatprep.subr.mxu0 0.0
  %1276 = vmatpush1.msra.mxu0 %v827
  %1277 = vmatprep.subr.mxu0 0.0
  %1278 = vmatpush1.msra.mxu0 %v828
  %1279 = vmatprep.subr.mxu0 0.0
  %1280 = vmatpush1.msra.mxu0 %v829
  %1281 = vmatprep.subr.mxu0 0.0
  %1282 = vmatpush1.msra.mxu0 %v830
  %1283 = vmatprep.subr.mxu0 0.0
  %1284 = vmatpush1.msra.mxu0 %v831
  %1285 = vmatprep.subr.mxu0 0.0
  %1286 = vmatpush1.msra.mxu0 %v832
  %1287 = vmatprep.subr.mxu0 0.0
  %1288 = vmatpush1.msra.mxu0 %v833
  %1289 = vmatprep.subr.mxu0 0.0
  %1290 = vmatpush1.msra.mxu0 %v834
  %1291 = vmatprep.subr.mxu0 0.0
  %1292 = vmatpush1.msra.mxu0 %v835
  %1293 = vmatprep.subr.mxu0 0.0
  %1294 = vmatpush1.msra.mxu0 %v836
  %1295 = vmatprep.subr.mxu0 0.0
  %1296 = vmatpush1.msra.mxu0 %v837
  %1297 = vmatprep.mubr.f32.mxu0 %v1041
  %1298 = vmatmul.mubr.f32.gmra.mrb[0].mxu0 %v1033
  %v1299 = vpop.f32.mrb[0].mxu0
  %v1300 = vadd.f32 %v1230, %v1299
  %v1301 = vpop.f32.mrb[0].mxu0
  %1302 = vdwg.mxu0
  %1303 = vmatprep.subr.mxu0 0.0
  %1304 = vmatpush1.msra.mxu0 %v838
  %1305 = vmatprep.subr.mxu0 0.0
  %1306 = vmatpush1.msra.mxu0 %v839
  %1307 = vmatprep.subr.mxu0 0.0
  %1308 = vmatpush1.msra.mxu0 %v840
  %1309 = vmatprep.subr.mxu0 0.0
  %1310 = vmatpush1.msra.mxu0 %v841
  %1311 = vmatprep.subr.mxu0 0.0
  %1312 = vmatpush1.msra.mxu0 %v842
  %1313 = vmatprep.subr.mxu0 0.0
  %1314 = vmatpush1.msra.mxu0 %v843
  %1315 = vmatprep.subr.mxu0 0.0
  %1316 = vmatpush1.msra.mxu0 %v844
  %1317 = vmatprep.subr.mxu0 0.0
  %1318 = vmatpush1.msra.mxu0 %v845
  %1319 = vmatprep.subr.mxu0 0.0
  %1320 = vmatpush1.msra.mxu0 %v846
  %1321 = vmatprep.subr.mxu0 0.0
  %1322 = vmatpush1.msra.mxu0 %v847
  %1323 = vmatprep.subr.mxu0 0.0
  %1324 = vmatpush1.msra.mxu0 %v848
  %1325 = vmatprep.subr.mxu0 0.0
  %1326 = vmatpush1.msra.mxu0 %v849
  %1327 = vmatprep.subr.mxu0 0.0
  %1328 = vmatpush1.msra.mxu0 %v850
  %1329 = vmatprep.subr.mxu0 0.0
  %1330 = vmatpush1.msra.mxu0 %v851
  %1331 = vmatprep.subr.mxu0 0.0
  %1332 = vmatpush1.msra.mxu0 %v852
  %1333 = vmatprep.subr.mxu0 0.0
  %1334 = vmatpush1.msra.mxu0 %v853
  %1335 = vmatprep.subr.mxu0 0.0
  %1336 = vmatpush1.msra.mxu0 %v854
  %1337 = vmatprep.subr.mxu0 0.0
  %1338 = vmatpush1.msra.mxu0 %v855
  %1339 = vmatprep.subr.mxu0 0.0
  %1340 = vmatpush1.msra.mxu0 %v856
  %1341 = vmatprep.subr.mxu0 0.0
  %1342 = vmatpush1.msra.mxu0 %v857
  %1343 = vmatprep.subr.mxu0 0.0
  %1344 = vmatpush1.msra.mxu0 %v858
  %1345 = vmatprep.subr.mxu0 0.0
  %1346 = vmatpush1.msra.mxu0 %v859
  %1347 = vmatprep.subr.mxu0 0.0
  %1348 = vmatpush1.msra.mxu0 %v860
  %1349 = vmatprep.subr.mxu0 0.0
  %1350 = vmatpush1.msra.mxu0 %v861
  %1351 = vmatprep.subr.mxu0 0.0
  %1352 = vmatpush1.msra.mxu0 %v862
  %1353 = vmatprep.subr.mxu0 0.0
  %1354 = vmatpush1.msra.mxu0 %v863
  %1355 = vmatprep.subr.mxu0 0.0
  %1356 = vmatpush1.msra.mxu0 %v864
  %1357 = vmatprep.subr.mxu0 0.0
  %1358 = vmatpush1.msra.mxu0 %v865
  %1359 = vmatprep.subr.mxu0 0.0
  %1360 = vmatpush1.msra.mxu0 %v866
  %1361 = vmatprep.subr.mxu0 0.0
  %1362 = vmatpush1.msra.mxu0 %v867
  %1363 = vmatprep.subr.mxu0 0.0
  %1364 = vmatpush1.msra.mxu0 %v868
  %1365 = vmatprep.subr.mxu0 0.0
  %1366 = vmatpush1.msra.mxu0 %v869
  %1367 = vmatprep.mubr.f32.mxu0 %v1042
  %1368 = vmatmul.mubr.f32.gmra.mrb[0].mxu0 %v1040
  %v1369 = vpop.f32.mrb[0].mxu0
  %v1370 = vadd.f32 %v1300, %v1369
  %v1371 = vpop.f32.mrb[0].mxu0
  %1372 = vdwg.mxu0
  %1373 = vmatprep.subr.mxu0 0.0
  %1374 = vmatpush1.msra.mxu0 %v870
  %1375 = vmatprep.subr.mxu0 0.0
  %1376 = vmatpush1.msra.mxu0 %v871
  %1377 = vmatprep.subr.mxu0 0.0
  %1378 = vmatpush1.msra.mxu0 %v872
  %1379 = vmatprep.subr.mxu0 0.0
  %1380 = vmatpush1.msra.mxu0 %v873
  %1381 = vmatprep.subr.mxu0 0.0
  %1382 = vmatpush1.msra.mxu0 %v874
  %1383 = vmatprep.subr.mxu0 0.0
  %1384 = vmatpush1.msra.mxu0 %v875
  %1385 = vmatprep.subr.mxu0 0.0
  %1386 = vmatpush1.msra.mxu0 %v876
  %1387 = vmatprep.subr.mxu0 0.0
  %1388 = vmatpush1.msra.mxu0 %v877
  %1389 = vmatprep.subr.mxu0 0.0
  %1390 = vmatpush1.msra.mxu0 %v878
  %1391 = vmatprep.subr.mxu0 0.0
  %1392 = vmatpush1.msra.mxu0 %v879
  %1393 = vmatprep.subr.mxu0 0.0
  %1394 = vmatpush1.msra.mxu0 %v880
  %1395 = vmatprep.subr.mxu0 0.0
  %1396 = vmatpush1.msra.mxu0 %v881
  %1397 = vmatprep.subr.mxu0 0.0
  %1398 = vmatpush1.msra.mxu0 %v882
  %1399 = vmatprep.subr.mxu0 0.0
  %1400 = vmatpush1.msra.mxu0 %v883
  %1401 = vmatprep.subr.mxu0 0.0
  %1402 = vmatpush1.msra.mxu0 %v884
  %1403 = vmatprep.subr.mxu0 0.0
  %1404 = vmatpush1.msra.mxu0 %v885
  %1405 = vmatprep.subr.mxu0 0.0
  %1406 = vmatpush1.msra.mxu0 %v886
  %1407 = vmatprep.subr.mxu0 0.0
  %1408 = vmatpush1.msra.mxu0 %v887
  %1409 = vmatprep.subr.mxu0 0.0
  %1410 = vmatpush1.msra.mxu0 %v888
  %1411 = vmatprep.subr.mxu0 0.0
  %1412 = vmatpush1.msra.mxu0 %v889
  %1413 = vmatprep.subr.mxu0 0.0
  %1414 = vmatpush1.msra.mxu0 %v890
  %1415 = vmatprep.subr.mxu0 0.0
  %1416 = vmatpush1.msra.mxu0 %v891
  %1417 = vmatprep.subr.mxu0 0.0
  %1418 = vmatpush1.msra.mxu0 %v892
  %1419 = vmatprep.subr.mxu0 0.0
  %1420 = vmatpush1.msra.mxu0 %v893
  %1421 = vmatprep.subr.mxu0 0.0
  %1422 = vmatpush1.msra.mxu0 %v894
  %1423 = vmatprep.subr.mxu0 0.0
  %1424 = vmatpush1.msra.mxu0 %v895
  %1425 = vmatprep.subr.mxu0 0.0
  %1426 = vmatpush1.msra.mxu0 %v896
  %1427 = vmatprep.subr.mxu0 0.0
  %1428 = vmatpush1.msra.mxu0 %v897
  %1429 = vmatprep.subr.mxu0 0.0
  %1430 = vmatpush1.msra.mxu0 %v898
  %1431 = vmatprep.subr.mxu0 0.0
  %1432 = vmatpush1.msra.mxu0 %v899
  %1433 = vmatprep.subr.mxu0 0.0
  %1434 = vmatpush1.msra.mxu0 %v900
  %1435 = vmatprep.subr.mxu0 0.0
  %1436 = vmatpush1.msra.mxu0 %v901
  %1437 = vmatprep.mubr.f32.mxu0 %v1058
  %1438 = vmatmul.mubr.f32.gmra.mrb[0].mxu0 %v1050
  %v1439 = vpop.f32.mrb[0].mxu0
  %v1440 = vadd.f32 %v1370, %v1439
  %v1441 = vpop.f32.mrb[0].mxu0
  %1442 = vdwg.mxu0
  %1443 = vmatprep.subr.mxu0 0.0
  %1444 = vmatpush1.msra.mxu0 %v902
  %1445 = vmatprep.subr.mxu0 0.0
  %1446 = vmatpush1.msra.mxu0 %v903
  %1447 = vmatprep.subr.mxu0 0.0
  %1448 = vmatpush1.msra.mxu0 %v904
  %1449 = vmatprep.subr.mxu0 0.0
  %1450 = vmatpush1.msra.mxu0 %v905
  %1451 = vmatprep.subr.mxu0 0.0
  %1452 = vmatpush1.msra.mxu0 %v906
  %1453 = vmatprep.subr.mxu0 0.0
  %1454 = vmatpush1.msra.mxu0 %v907
  %1455 = vmatprep.subr.mxu0 0.0
  %1456 = vmatpush1.msra.mxu0 %v908
  %1457 = vmatprep.subr.mxu0 0.0
  %1458 = vmatpush1.msra.mxu0 %v909
  %1459 = vmatprep.subr.mxu0 0.0
  %1460 = vmatpush1.msra.mxu0 %v910
  %1461 = vmatprep.subr.mxu0 0.0
  %1462 = vmatpush1.msra.mxu0 %v911
  %1463 = vmatprep.subr.mxu0 0.0
  %1464 = vmatpush1.msra.mxu0 %v912
  %1465 = vmatprep.subr.mxu0 0.0
  %1466 = vmatpush1.msra.mxu0 %v913
  %1467 = vmatprep.subr.mxu0 0.0
  %1468 = vmatpush1.msra.mxu0 %v914
  %1469 = vmatprep.subr.mxu0 0.0
  %1470 = vmatpush1.msra.mxu0 %v915
  %1471 = vmatprep.subr.mxu0 0.0
  %1472 = vmatpush1.msra.mxu0 %v916
  %1473 = vmatprep.subr.mxu0 0.0
  %1474 = vmatpush1.msra.mxu0 %v917
  %1475 = vmatprep.subr.mxu0 0.0
  %1476 = vmatpush1.msra.mxu0 %v918
  %1477 = vmatprep.subr.mxu0 0.0
  %1478 = vmatpush1.msra.mxu0 %v919
  %1479 = vmatprep.subr.mxu0 0.0
  %1480 = vmatpush1.msra.mxu0 %v920
  %1481 = vmatprep.subr.mxu0 0.0
  %1482 = vmatpush1.msra.mxu0 %v921
  %1483 = vmatprep.subr.mxu0 0.0
  %1484 = vmatpush1.msra.mxu0 %v922
  %1485 = vmatprep.subr.mxu0 0.0
  %1486 = vmatpush1.msra.mxu0 %v923
  %1487 = vmatprep.subr.mxu0 0.0
  %1488 = vmatpush1.msra.mxu0 %v924
  %1489 = vmatprep.subr.mxu0 0.0
  %1490 = vmatpush1.msra.mxu0 %v925
  %1491 = vmatprep.subr.mxu0 0.0
  %1492 = vmatpush1.msra.mxu0 %v926
  %1493 = vmatprep.subr.mxu0 0.0
  %1494 = vmatpush1.msra.mxu0 %v927
  %1495 = vmatprep.subr.mxu0 0.0
  %1496 = vmatpush1.msra.mxu0 %v928
  %1497 = vmatprep.subr.mxu0 0.0
  %1498 = vmatpush1.msra.mxu0 %v929
  %1499 = vmatprep.subr.mxu0 0.0
  %1500 = vmatpush1.msra.mxu0 %v930
  %1501 = vmatprep.subr.mxu0 0.0
  %1502 = vmatpush1.msra.mxu0 %v931
  %1503 = vmatprep.subr.mxu0 0.0
  %1504 = vmatpush1.msra.mxu0 %v932
  %1505 = vmatprep.subr.mxu0 0.0
  %1506 = vmatpush1.msra.mxu0 %v933
  %1507 = vmatprep.mubr.f32.mxu0 %v1059
  %1508 = vmatmul.mubr.f32.gmra.mrb[0].mxu0 %v1057
  %v1509 = vpop.f32.mrb[0].mxu0
  %v1510 = vadd.f32 %v1440, %v1509
  %v1511 = vpop.f32.mrb[0].mxu0
  %1512 = vdwg.mxu0
  %1513 = vmatprep.subr.mxu0 0.0
  %1514 = vmatpush1.msra.mxu0 %v934
  %1515 = vmatprep.subr.mxu0 0.0
  %1516 = vmatpush1.msra.mxu0 %v935
  %1517 = vmatprep.subr.mxu0 0.0
  %1518 = vmatpush1.msra.mxu0 %v936
  %1519 = vmatprep.subr.mxu0 0.0
  %1520 = vmatpush1.msra.mxu0 %v937
  %1521 = vmatprep.subr.mxu0 0.0
  %1522 = vmatpush1.msra.mxu0 %v938
  %1523 = vmatprep.subr.mxu0 0.0
  %1524 = vmatpush1.msra.mxu0 %v939
  %1525 = vmatprep.subr.mxu0 0.0
  %1526 = vmatpush1.msra.mxu0 %v940
  %1527 = vmatprep.subr.mxu0 0.0
  %1528 = vmatpush1.msra.mxu0 %v941
  %1529 = vmatprep.subr.mxu0 0.0
  %1530 = vmatpush1.msra.mxu0 %v942
  %1531 = vmatprep.subr.mxu0 0.0
  %1532 = vmatpush1.msra.mxu0 %v943
  %1533 = vmatprep.subr.mxu0 0.0
  %1534 = vmatpush1.msra.mxu0 %v944
  %1535 = vmatprep.subr.mxu0 0.0
  %1536 = vmatpush1.msra.mxu0 %v945
  %1537 = vmatprep.subr.mxu0 0.0
  %1538 = vmatpush1.msra.mxu0 %v946
  %1539 = vmatprep.subr.mxu0 0.0
  %1540 = vmatpush1.msra.mxu0 %v947
  %1541 = vmatprep.subr.mxu0 0.0
  %1542 = vmatpush1.msra.mxu0 %v948
  %1543 = vmatprep.subr.mxu0 0.0
  %1544 = vmatpush1.msra.mxu0 %v949
  %1545 = vmatprep.subr.mxu0 0.0
  %1546 = vmatpush1.msra.mxu0 %v950
  %1547 = vmatprep.subr.mxu0 0.0
  %1548 = vmatpush1.msra.mxu0 %v951
  %1549 = vmatprep.subr.mxu0 0.0
  %1550 = vmatpush1.msra.mxu0 %v952
  %1551 = vmatprep.subr.mxu0 0.0
  %1552 = vmatpush1.msra.mxu0 %v953
  %1553 = vmatprep.subr.mxu0 0.0
  %1554 = vmatpush1.msra.mxu0 %v954
  %1555 = vmatprep.subr.mxu0 0.0
  %1556 = vmatpush1.msra.mxu0 %v955
  %1557 = vmatprep.subr.mxu0 0.0
  %1558 = vmatpush1.msra.mxu0 %v956
  %1559 = vmatprep.subr.mxu0 0.0
  %1560 = vmatpush1.msra.mxu0 %v957
  %1561 = vmatprep.subr.mxu0 0.0
  %1562 = vmatpush1.msra.mxu0 %v958
  %1563 = vmatprep.subr.mxu0 0.0
  %1564 = vmatpush1.msra.mxu0 %v959
  %1565 = vmatprep.subr.mxu0 0.0
  %1566 = vmatpush1.msra.mxu0 %v960
  %1567 = vmatprep.subr.mxu0 0.0
  %1568 = vmatpush1.msra.mxu0 %v961
  %1569 = vmatprep.subr.mxu0 0.0
  %1570 = vmatpush1.msra.mxu0 %v962
  %1571 = vmatprep.subr.mxu0 0.0
  %1572 = vmatpush1.msra.mxu0 %v963
  %1573 = vmatprep.subr.mxu0 0.0
  %1574 = vmatpush1.msra.mxu0 %v964
  %1575 = vmatprep.subr.mxu0 0.0
  %1576 = vmatpush1.msra.mxu0 %v965
  %1577 = vmatprep.mubr.f32.mxu0 %v1075
  %1578 = vmatmul.mubr.f32.gmra.mrb[0].mxu0 %v1067
  %v1579 = vpop.f32.mrb[0].mxu0
  %v1580 = vadd.f32 %v1510, %v1579
  %v1581 = vpop.f32.mrb[0].mxu0
  %1582 = vdwg.mxu0
  %1583 = vmatprep.subr.mxu0 0.0
  %1584 = vmatpush1.msra.mxu0 %v966
  %1585 = vmatprep.subr.mxu0 0.0
  %1586 = vmatpush1.msra.mxu0 %v967
  %1587 = vmatprep.subr.mxu0 0.0
  %1588 = vmatpush1.msra.mxu0 %v968
  %1589 = vmatprep.subr.mxu0 0.0
  %1590 = vmatpush1.msra.mxu0 %v969
  %1591 = vmatprep.subr.mxu0 0.0
  %1592 = vmatpush1.msra.mxu0 %v970
  %1593 = vmatprep.subr.mxu0 0.0
  %1594 = vmatpush1.msra.mxu0 %v971
  %1595 = vmatprep.subr.mxu0 0.0
  %1596 = vmatpush1.msra.mxu0 %v972
  %1597 = vmatprep.subr.mxu0 0.0
  %1598 = vmatpush1.msra.mxu0 %v973
  %1599 = vmatprep.subr.mxu0 0.0
  %1600 = vmatpush1.msra.mxu0 %v974
  %1601 = vmatprep.subr.mxu0 0.0
  %1602 = vmatpush1.msra.mxu0 %v975
  %1603 = vmatprep.subr.mxu0 0.0
  %1604 = vmatpush1.msra.mxu0 %v976
  %1605 = vmatprep.subr.mxu0 0.0
  %1606 = vmatpush1.msra.mxu0 %v977
  %1607 = vmatprep.subr.mxu0 0.0
  %1608 = vmatpush1.msra.mxu0 %v978
  %1609 = vmatprep.subr.mxu0 0.0
  %1610 = vmatpush1.msra.mxu0 %v979
  %1611 = vmatprep.subr.mxu0 0.0
  %1612 = vmatpush1.msra.mxu0 %v980
  %1613 = vmatprep.subr.mxu0 0.0
  %1614 = vmatpush1.msra.mxu0 %v981
  %1615 = vmatprep.subr.mxu0 0.0
  %1616 = vmatpush1.msra.mxu0 %v982
  %1617 = vmatprep.subr.mxu0 0.0
  %1618 = vmatpush1.msra.mxu0 %v983
  %1619 = vmatprep.subr.mxu0 0.0
  %1620 = vmatpush1.msra.mxu0 %v984
  %1621 = vmatprep.subr.mxu0 0.0
  %1622 = vmatpush1.msra.mxu0 %v985
  %1623 = vmatprep.subr.mxu0 0.0
  %1624 = vmatpush1.msra.mxu0 %v986
  %1625 = vmatprep.subr.mxu0 0.0
  %1626 = vmatpush1.msra.mxu0 %v987
  %1627 = vmatprep.subr.mxu0 0.0
  %1628 = vmatpush1.msra.mxu0 %v988
  %1629 = vmatprep.subr.mxu0 0.0
  %1630 = vmatpush1.msra.mxu0 %v989
  %1631 = vmatprep.subr.mxu0 0.0
  %1632 = vmatpush1.msra.mxu0 %v990
  %1633 = vmatprep.subr.mxu0 0.0
  %1634 = vmatpush1.msra.mxu0 %v991
  %1635 = vmatprep.subr.mxu0 0.0
  %1636 = vmatpush1.msra.mxu0 %v992
  %1637 = vmatprep.subr.mxu0 0.0
  %1638 = vmatpush1.msra.mxu0 %v993
  %1639 = vmatprep.subr.mxu0 0.0
  %1640 = vmatpush1.msra.mxu0 %v994
  %1641 = vmatprep.subr.mxu0 0.0
  %1642 = vmatpush1.msra.mxu0 %v995
  %1643 = vmatprep.subr.mxu0 0.0
  %1644 = vmatpush1.msra.mxu0 %v996
  %1645 = vmatprep.subr.mxu0 0.0
  %1646 = vmatpush1.msra.mxu0 %v997
  %1647 = vmatprep.mubr.f32.mxu0 %v1076
  %1648 = vmatmul.mubr.f32.gmra.mrb[0].mxu0 %v1074
  %v1649 = vpop.f32.mrb[0].mxu0
  %v1650 = vadd.f32 %v1580, %v1649
  %v1651 = vpop.f32.mrb[0].mxu0
  %1652 = vdwg.mxu0
  %v1653 = vmax.f32 %v1650, 0.0
  %v1654 = vld [vmem:[%s10] sm:$0xff]
  %v1655 = vld [vmem:[%s10 + $0x8] sm:$0xff]
  %v1656 = vld [vmem:[#allocation4] sm:$0x1]
  %v1658 = vlaneseq
  %v1659 = vshrl.u32 %v1658, 7
  %v1660 = vsub.s32 0, %v1659
  %v1661 = vrot.slane %v1656, %v1660
  %vm1663 = vcmask 130048
  %v1665 = vsel %vm1663, %v1653, 0
  %1667 = vmatprep.subr.mxu0 0.0
  %1668 = vmatpush1.msra.mxu0 %v1654
  %1669 = vmatprep.subr.mxu0 0.0
  %1670 = vmatpush1.msra.mxu0 %v1655
  %1671 = vmatprep.subr.mxu0 0.0
  %1672 = vmatpush1.msra.mxu0 0.0
  %1673 = vmatprep.subr.mxu0 0.0
  %1674 = vmatpush1.msra.mxu0 0.0
  %1675 = vmatprep.subr.mxu0 0.0
  %1676 = vmatpush1.msra.mxu0 0.0
  %1677 = vmatprep.subr.mxu0 0.0
  %1678 = vmatpush1.msra.mxu0 0.0
  %1679 = vmatprep.subr.mxu0 0.0
  %1680 = vmatpush1.msra.mxu0 0.0
  %1681 = vmatprep.subr.mxu0 0.0
  %1682 = vmatpush1.msra.mxu0 0.0
  %1683 = vmatprep.subr.mxu0 0.0
  %1684 = vmatpush1.msra.mxu0 0.0
  %1685 = vmatprep.subr.mxu0 0.0
  %1686 = vmatpush1.msra.mxu0 0.0
  %1687 = vmatprep.subr.mxu0 0.0
  %1688 = vmatpush1.msra.mxu0 0.0
  %1689 = vmatprep.subr.mxu0 0.0
  %1690 = vmatpush1.msra.mxu0 0.0
  %1691 = vmatprep.subr.mxu0 0.0
  %1692 = vmatpush1.msra.mxu0 0.0
  %1693 = vmatprep.subr.mxu0 0.0
  %1694 = vmatpush1.msra.mxu0 0.0
  %1695 = vmatprep.subr.mxu0 0.0
  %1696 = vmatpush1.msra.mxu0 0.0
  %1697 = vmatprep.subr.mxu0 0.0
  %1698 = vmatpush1.msra.mxu0 0.0
  %1699 = vmatprep.subr.mxu0 0.0
  %1700 = vmatpush1.msra.mxu0 0.0
  %1701 = vmatprep.subr.mxu0 0.0
  %1702 = vmatpush1.msra.mxu0 0.0
  %1703 = vmatprep.subr.mxu0 0.0
  %1704 = vmatpush1.msra.mxu0 0.0
  %1705 = vmatprep.subr.mxu0 0.0
  %1706 = vmatpush1.msra.mxu0 0.0
  %1707 = vmatprep.subr.mxu0 0.0
  %1708 = vmatpush1.msra.mxu0 0.0
  %1709 = vmatprep.subr.mxu0 0.0
  %1710 = vmatpush1.msra.mxu0 0.0
  %1711 = vmatprep.subr.mxu0 0.0
  %1712 = vmatpush1.msra.mxu0 0.0
  %1713 = vmatprep.subr.mxu0 0.0
  %1714 = vmatpush1.msra.mxu0 0.0
  %1715 = vmatprep.subr.mxu0 0.0
  %1716 = vmatpush1.msra.mxu0 0.0
  %1717 = vmatprep.subr.mxu0 0.0
  %1718 = vmatpush1.msra.mxu0 0.0
  %1719 = vmatprep.subr.mxu0 0.0
  %1720 = vmatpush1.msra.mxu0 0.0
  %1721 = vmatprep.subr.mxu0 0.0
  %1722 = vmatpush1.msra.mxu0 0.0
  %1723 = vmatprep.subr.mxu0 0.0
  %1724 = vmatpush1.msra.mxu0 0.0
  %1725 = vmatprep.subr.mxu0 0.0
  %1726 = vmatpush1.msra.mxu0 0.0
  %1727 = vmatprep.subr.mxu0 0.0
  %1728 = vmatpush1.msra.mxu0 0.0
  %1729 = vmatprep.subr.mxu0 0.0
  %1730 = vmatpush1.msra.mxu0 0.0
  %1731 = vmatprep.mubr.f32.mxu0 0.0
  %1732 = vmatmul.mubr.f32.gmra.mrb[0].mxu0 %v1665
  %v1733 = vpop.f32.mrb[0].mxu0
  %v1734 = vadd.f32 %v1661, %v1733
  %v1735 = vpop.f32.mrb[0].mxu0
  %1736 = vdwg.mxu0
  %v1737 = vsub.f32 0.0, %v1734
  %v1738 = vmul.f32 %v1737, 1.442695
  %v1739 = vpow.pop %v1738
  %v1740 = vadd.f32 %v1739, 1.0
  %v1741 = vrcp.pop %v1740
  %v1742 = vmul.f32 1.0, %v1741
  %vm1743 = vcmask 1024
  %1744 = vst.msk [vmem:[%s12] sm:$0x3] %vm1743, %v1742
  // Predicated region
  $region50: #{rna_conv1d_forward.1} parent=0 // pred_check
    _
  $region51: #{rna_conv1d_forward.1} parent=0 // pred_check_branch
    %1746 = sbr.rel (0) target = $region53
  $region52: #{rna_conv1d_forward.1} parent=0 // pred_region
    _
  $region53: #{rna_conv1d_forward.1} parent=0 // pred_fallthru
    _
  // Predicated region
  $region54: #{rna_conv1d_forward.1} parent=0 // pred_check
    _
  $region55: #{rna_conv1d_forward.1} parent=0 // pred_check_branch
    %1748 = sbr.rel (0) target = $region57
  $region56: #{rna_conv1d_forward.1} parent=0 // pred_region
    _
  $region57: #{rna_conv1d_forward.1} parent=0 // pred_fallthru
    _

</llo_original>
